<compile_context>
chip_gen: v6e
topology: v6e:2x2x1
jax: 0.10.0
libtpu: 0.0.40
codegen_flags: <defaults>
</compile_context>

<pallas_src>
import functools

import jax
import jax.numpy as jnp
import numpy as np
from jax.experimental import pallas as pl
from jax.experimental.pallas import tpu as pltpu

EPS = 1e-5


def _round_up(a, b):
    return (a + b - 1) // b * b


def _cdiv(a, b):
    return (a + b - 1) // b


def _vmem_capacity_bytes():
    try:
        info = pltpu.get_tpu_info()
        cap = getattr(info, "vmem_capacity_bytes", None)
        if cap:
            return int(cap)
    except Exception:
        pass
    return 128 * 2**20


def _layer_norm_channel(x, gamma, beta, mask, inv_c):
    """LayerNormChannel over the last dim; padded lanes of x are zero."""
    u = jnp.sum(x, axis=-1, keepdims=True) * inv_c
    xc = x - u
    xm = xc if mask is None else xc * mask
    var = jnp.sum(xc * xm, axis=-1, keepdims=True) * inv_c
    return (xc * jax.lax.rsqrt(var + EPS)) * gamma + beta


def metaformer_block_kernel(
    x_ref,      # (tm, C_pad)        f32 activation tile
    p_ref,      # (8, C_pad)         f32 packed params:
                #   rows: 0 norm1_w, 1 norm1_b, 2 ls1, 3 norm2_w, 4 norm2_b,
                #         5 ls2, 6 fc2 bias, 7 zero pad
    b1_ref,     # (1, Hd_pad)        f32 fc1 bias (resident)
    w1_ref,     # (C_pad, Hd_pad|hc) bf16 fc1 weight (resident or chunk)
    w2_ref,     # (Hd_pad|hc, C_pad) bf16 fc2 weight (resident or chunk)
    o_ref,      # (tm, C_pad)        f32 output block (doubles as accumulator)
    y_scr,      # (tm, C_pad)        f32   residual-1 output
    n2_scr,     # (tm, C_pad)        bf16  norm2 output (MXU LHS, resident)
    *,
    c_real,
    hc,
    approx_gelu,
    weights_resident,
):
    k = pl.program_id(1)
    inv_c = 1.0 / float(c_real)

    # ---- k == 0: both layer norms, residual 1, accumulator init ------------
    @pl.when(k == 0)
    def _():
        x = x_ref[...].astype(jnp.float32)
        c_pad = x.shape[-1]
        if c_real == c_pad:
            mask = None
        else:
            lane = jax.lax.broadcasted_iota(jnp.int32, (1, c_pad), 1)
            mask = (lane < c_real).astype(jnp.float32)

        g1, bt1, ls1 = p_ref[0:1, :], p_ref[1:2, :], p_ref[2:3, :]
        g2, bt2 = p_ref[3:4, :], p_ref[4:5, :]

        n1 = _layer_norm_channel(x, g1, bt1, mask, inv_c)
        y = x + ls1 * n1                      # token_mixer = Identity
        y_scr[...] = y

        n2 = _layer_norm_channel(y, g2, bt2, mask, inv_c)
        n2_scr[...] = n2.astype(n2_scr.dtype)

        o_ref[...] = jnp.zeros_like(o_ref)    # MLP accumulator lives in o_ref

    # ---- every k: one hidden-dim chunk of the MLP on the MXU ---------------
    off = pl.multiple_of(k * hc, 128)
    b1 = b1_ref[:, pl.ds(off, hc)]
    if weights_resident:
        w1 = w1_ref[:, pl.ds(off, hc)]
        w2 = w2_ref[pl.ds(off, hc), :]
    else:
        w1 = w1_ref[...]
        w2 = w2_ref[...]

    h = jnp.dot(n2_scr[...], w1, preferred_element_type=jnp.float32)
    h = h + b1
    h = jax.nn.gelu(h, approximate=approx_gelu)
    o_ref[...] += jnp.dot(h.astype(w2.dtype), w2,
                          preferred_element_type=jnp.float32)

    # ---- last k: bias, layer-scale, residual 2 ------------------------------
    @pl.when(k == pl.num_programs(1) - 1)
    def _():
        ls2, b2 = p_ref[5:6, :], p_ref[6:7, :]
        o_ref[...] = (y_scr[...] + ls2 * (o_ref[...] + b2)).astype(o_ref.dtype)


@functools.partial(jax.jit,
                   static_argnames=("tm", "hc_max", "approx_gelu", "resident"))
def metaformer_block(x_nchw, params, tm=512, hc_max=512, approx_gelu=True,
                     resident=None):
    """x_nchw: [B, C, H, W]. Returns same shape/dtype."""
    B, C, H, W = x_nchw.shape
    Hd = params["w1"].shape[1]
    assert tm % 8 == 0 and hc_max >= 128

    n_tok = B * H * W
    C_pad = _round_up(C, 128)

    # ---- hidden-dim chunking: pad Hd UP to nk * hc (keep hc >= 256 if cheap) ---
    hc_cap = max(128, min((hc_max // 128) * 128, _round_up(Hd, 128)))
    best = None
    for cand in range(128, hc_cap + 1, 128):
        nk_c = _cdiv(Hd, cand)
        total = nk_c * cand
        score = (total * (1.3 if cand < 256 else 1.0), -cand)
        if best is None or score < best[0]:
            best = (score, cand, nk_c, total)
    _, hc, nk, Hd_pad = best

    # ---- token tiling: even tile count (>1) for 2-TensorCore balance -----------
    n_tok8 = _round_up(n_tok, 8)
    if n_tok8 <= tm:
        tm_eff, n_tiles = n_tok8, 1
    else:
        n_tiles = _cdiv(n_tok8, tm)
        if n_tiles % 2:
            n_tiles += 1
        tm_eff = _round_up(_cdiv(n_tok8, n_tiles), 8)
    n_tok_pad = tm_eff * n_tiles

    # NCHW -> NHWC -> (tokens, C), zero-pad tokens and channels (padded lanes
    # carry zero params so they stay exactly zero through the whole block).
    x_tok = jnp.transpose(x_nchw, (0, 2, 3, 1)).reshape(n_tok, C)
    x_tok = jnp.pad(x_tok.astype(jnp.float32),
                    ((0, n_tok_pad - n_tok), (0, C_pad - C)))

    f32 = jnp.float32

    def padc(v):
        return jnp.pad(v.astype(f32), (0, C_pad - C))

    p_packed = jnp.stack([
        padc(params["norm1_w"]), padc(params["norm1_b"]), padc(params["ls1"]),
        padc(params["norm2_w"]), padc(params["norm2_b"]), padc(params["ls2"]),
        padc(params["b2"]), jnp.zeros((C_pad,), f32),
    ])                                                     # (8, C_pad) f32

    b1 = jnp.pad(params["b1"].astype(f32), (0, Hd_pad - Hd)).reshape(1, Hd_pad)
    w1 = jnp.pad(params["w1"], ((0, C_pad - C), (0, Hd_pad - Hd))).astype(jnp.bfloat16)
    w2 = jnp.pad(params["w2"], ((0, Hd_pad - Hd), (0, C_pad - C))).astype(jnp.bfloat16)

    # ---- VMEM budget (double-buffered pipelined tiles + scratch) ------------
    def nbytes(shape, dtype):
        return int(np.prod(shape)) * jnp.dtype(dtype).itemsize

    cap = _vmem_capacity_bytes()
    act_bytes = (
        2 * 2 * nbytes((tm_eff, C_pad), f32)            # x in + out, x2 buffers
        + 2 * nbytes((8, C_pad), f32)                   # packed params
        + 2 * nbytes((8, Hd_pad), f32)                  # fc1 bias (sublane-padded)
        + nbytes((tm_eff, C_pad), f32)                  # y scratch
        + nbytes((tm_eff, C_pad), jnp.bfloat16)         # n2 scratch
    )
    w_full_bytes = 2 * 2 * nbytes((C_pad, Hd_pad), jnp.bfloat16)   # w1 + w2
    w_chunk_bytes = 2 * 2 * nbytes((C_pad, hc), jnp.bfloat16)

    if resident is None:
        weights_resident = (act_bytes + w_full_bytes) <= int(0.5 * cap)
    else:
        weights_resident = bool(resident)

    est = act_bytes + (w_full_bytes if weights_resident else w_chunk_bytes)
    vmem_bytes = int(min(int(0.75 * cap), max(32 * 2**20, 2 * est)))

    w_passes = 1 if weights_resident else n_tiles
    cost = pl.CostEstimate(
        flops=4 * n_tok_pad * C_pad * Hd_pad,
        transcendentals=n_tok_pad * Hd_pad,
        bytes_accessed=(2 * n_tok_pad * C_pad * 4
                        + w_passes * 2 * C_pad * Hd_pad * 2
                        + 8 * C_pad * 4 + 8 * Hd_pad * 4),
    )

    if weights_resident:
        w1_spec = pl.BlockSpec((C_pad, Hd_pad), lambda i, k: (0, 0))
        w2_spec = pl.BlockSpec((Hd_pad, C_pad), lambda i, k: (0, 0))
    else:
        w1_spec = pl.BlockSpec((C_pad, hc), lambda i, k: (0, k))
        w2_spec = pl.BlockSpec((hc, C_pad), lambda i, k: (k, 0))

    kernel = functools.partial(metaformer_block_kernel,
                               c_real=C, hc=hc, approx_gelu=approx_gelu,
                               weights_resident=weights_resident)

    out = pl.pallas_call(
        kernel,
        out_shape=jax.ShapeDtypeStruct((n_tok_pad, C_pad), jnp.float32),
        grid_spec=pltpu.PrefetchScalarGridSpec(
            num_scalar_prefetch=0,
            grid=(n_tiles, nk),
            in_specs=[
                pl.BlockSpec((tm_eff, C_pad), lambda i, k: (i, 0)),   # x tile
                pl.BlockSpec((8, C_pad), lambda i, k: (0, 0)),        # packed params
                pl.BlockSpec((1, Hd_pad), lambda i, k: (0, 0)),       # fc1 bias (resident)
                w1_spec,                                              # fc1 weight
                w2_spec,                                              # fc2 weight
            ],
            out_specs=pl.BlockSpec((tm_eff, C_pad), lambda i, k: (i, 0)),
            scratch_shapes=[
                pltpu.VMEM((tm_eff, C_pad), jnp.float32),    # y  (residual 1)
                pltpu.VMEM((tm_eff, C_pad), jnp.bfloat16),   # n2 (MXU LHS)
            ],
        ),
        compiler_params=pltpu.CompilerParams(
            dimension_semantics=("parallel", "arbitrary"),
            vmem_limit_bytes=vmem_bytes,
        ),
        cost_estimate=cost,
    )(x_tok, p_packed, b1, w1, w2)

    out = out[:n_tok, :C].astype(x_nchw.dtype)
    return jnp.transpose(out.reshape(B, H, W, C), (0, 3, 1, 2))


def make_params(dim, mlp_ratio=4.0, layer_scale_init_value=1e-5, seed=1):
    """Deterministic parameter init mirroring the module's __init__ shapes."""
    hidden = int(dim * mlp_ratio)
    k1, k2 = jax.random.split(jax.random.PRNGKey(seed), 2)
    return {
        # LayerNormChannel: weight=ones, bias=zeros
        "norm1_w": jnp.ones((dim,), jnp.float32),
        "norm1_b": jnp.zeros((dim,), jnp.float32),
        "norm2_w": jnp.ones((dim,), jnp.float32),
        "norm2_b": jnp.zeros((dim,), jnp.float32),
        # layer_scale_{1,2} = layer_scale_init_value * ones(dim)
        "ls1": layer_scale_init_value * jnp.ones((dim,), jnp.float32),
        "ls2": layer_scale_init_value * jnp.ones((dim,), jnp.float32),
        # Mlp: fc1 = Conv2d(dim, hidden, 1), fc2 = Conv2d(hidden, dim, 1),
        # stored as matmul weights (in, out) for the tokens-x-channels layout.
        "w1": (jax.random.normal(k1, (dim, hidden), jnp.float32)
               * (1.0 / np.sqrt(dim))),
        "b1": jnp.zeros((hidden,), jnp.float32),
        "w2": (jax.random.normal(k2, (hidden, dim), jnp.float32)
               * (1.0 / np.sqrt(hidden))),
        "b2": jnp.zeros((dim,), jnp.float32),
    }


def reference_forward(x_nchw, params):
    """Pure-JAX reference matching the PyTorch module exactly (NCHW math)."""
    def norm_channel(x, w, b):
        u = jnp.mean(x, axis=1, keepdims=True)
        s = jnp.mean((x - u) ** 2, axis=1, keepdims=True)
        xn = (x - u) / jnp.sqrt(s + EPS)
        return w[None, :, None, None] * xn + b[None, :, None, None]

    def mlp(x):  # 1x1 convs as einsum over the channel dim
        h = jnp.einsum("bchw,cd->bdhw", x, params["w1"]) \
            + params["b1"][None, :, None, None]
        h = jax.nn.gelu(h, approximate=False)
        o = jnp.einsum("bdhw,dc->bchw", h, params["w2"]) \
            + params["b2"][None, :, None, None]
        return o

    ls1 = params["ls1"][None, :, None, None]
    ls2 = params["ls2"][None, :, None, None]
    x = x_nchw + ls1 * norm_channel(x_nchw, params["norm1_w"], params["norm1_b"])
    x = x + ls2 * mlp(norm_channel(x, params["norm2_w"], params["norm2_b"]))
    return x


if __name__ == "__main__":
    # Small shapes, chosen to exercise channel/hidden padding, multiple token
    # tiles and >1 hidden chunk: batch=2, dim=48, spatial=16x16, hidden=192.
    B, C, H, W = 2, 48, 16, 16
    x = jax.random.normal(jax.random.PRNGKey(0), (B, C, H, W), jnp.float32)
    params = make_params(C, mlp_ratio=4.0)
    ref = reference_forward(x, params)

    # Resident-weight path: 2 token tiles, 2 hidden chunks (in-kernel pl.ds slicing).
    out = metaformer_block(x, params, tm=256, hc_max=128)
    out = jax.block_until_ready(out)
    np.testing.assert_allclose(np.asarray(out), np.asarray(ref),
                               rtol=1e-3, atol=1e-3)

    # Streamed-weight path (per-chunk weight DMA) with default token tiling.
    out2 = metaformer_block(x, params, hc_max=128, resident=False)
    out2 = jax.block_until_ready(out2)
    np.testing.assert_allclose(np.asarray(out2), np.asarray(ref),
                               rtol=1e-3, atol=1e-3)

    print("KERNEL_OK")
</pallas_src>

<mosaic_0001>
module attributes {stable_mosaic.version = 11 : i64} {
  func.func @metaformer_block_kernel(%arg0: i32, %arg1: i32, %arg2: memref<256x128xf32, #tpu.memory_space<vmem>>, %arg3: memref<8x128xf32, #tpu.memory_space<vmem>>, %arg4: memref<1x256xf32, #tpu.memory_space<vmem>>, %arg5: memref<128x256xbf16, #tpu.memory_space<vmem>>, %arg6: memref<256x128xbf16, #tpu.memory_space<vmem>>, %arg7: memref<256x128xf32, #tpu.memory_space<vmem>>, %arg8: memref<256x128xf32, #tpu.memory_space<vmem>>, %arg9: memref<256x128xbf16, #tpu.memory_space<vmem>>) attributes {dimension_semantics = [#tpu.dimension_semantics<parallel>, #tpu.dimension_semantics<arbitrary>], iteration_bounds = array<i64: 2, 2>, scalar_prefetch = 0 : i64, scratch_operands = 2 : i64, tpu.core_type = #tpu.core_type<tc>, window_params = [{transform_indices = @transform_0, window_bounds = array<i64: 256, 128>}, {pipeline_mode = #tpu.pipeline_mode<synchronous>, transform_indices = @transform_1, window_bounds = array<i64: 8, 128>}, {pipeline_mode = #tpu.pipeline_mode<synchronous>, transform_indices = @transform_2, window_bounds = array<i64: 1, 256>}, {pipeline_mode = #tpu.pipeline_mode<synchronous>, transform_indices = @transform_3, window_bounds = array<i64: 128, 256>}, {pipeline_mode = #tpu.pipeline_mode<synchronous>, transform_indices = @transform_4, window_bounds = array<i64: 256, 128>}, {transform_indices = @transform_5, window_bounds = array<i64: 256, 128>}]} {
    %c0_i32 = arith.constant 0 : i32
    %0 = arith.cmpi eq, %arg1, %c0_i32 : i32
    %1 = arith.extui %0 : i1 to i32
    %c0_i32_0 = arith.constant 0 : i32
    %2 = arith.cmpi ne, %1, %c0_i32_0 : i32
    scf.if %2 {
      %c0_15 = arith.constant 0 : index
      %c0_16 = arith.constant 0 : index
      %36 = vector.load %arg2[%c0_15, %c0_16] : memref<256x128xf32, #tpu.memory_space<vmem>>, vector<256x128xf32>
      %37 = tpu.iota {dimensions = array<i32: 1>} : vector<1x128xi32>
      %c48_i32 = arith.constant 48 : i32
      %38 = vector.broadcast %c48_i32 : i32 to vector<1x128xi32>
      %39 = arith.cmpi slt, %37, %38 : vector<1x128xi32>
      %40 = arith.extui %39 : vector<1x128xi1> to vector<1x128xi32>
      %41 = arith.sitofp %40 : vector<1x128xi32> to vector<1x128xf32>
      %c0_17 = arith.constant 0 : index
      %c0_18 = arith.constant 0 : index
      %42 = vector.load %arg3[%c0_17, %c0_18] : memref<8x128xf32, #tpu.memory_space<vmem>>, vector<1x128xf32>
      %c1 = arith.constant 1 : index
      %c0_19 = arith.constant 0 : index
      %43 = vector.load %arg3[%c1, %c0_19] : memref<8x128xf32, #tpu.memory_space<vmem>>, vector<1x128xf32>
      %c2 = arith.constant 2 : index
      %c0_20 = arith.constant 0 : index
      %44 = vector.load %arg3[%c2, %c0_20] : memref<8x128xf32, #tpu.memory_space<vmem>>, vector<1x128xf32>
      %c3 = arith.constant 3 : index
      %c0_21 = arith.constant 0 : index
      %45 = vector.load %arg3[%c3, %c0_21] : memref<8x128xf32, #tpu.memory_space<vmem>>, vector<1x128xf32>
      %c4 = arith.constant 4 : index
      %c0_22 = arith.constant 0 : index
      %46 = vector.load %arg3[%c4, %c0_22] : memref<8x128xf32, #tpu.memory_space<vmem>>, vector<1x128xf32>
      %cst_23 = arith.constant dense<0.000000e+00> : vector<256xf32>
      %47 = vector.multi_reduction <add>, %36, %cst_23 [1] : vector<256x128xf32> to vector<256xf32>
      %48 = vector.shape_cast %47 : vector<256xf32> to vector<256x1xf32>
      %cst_24 = arith.constant 0.020833334 : f32
      %49 = vector.broadcast %cst_24 : f32 to vector<256x1xf32>
      %50 = arith.mulf %48, %49 : vector<256x1xf32>
      %51 = vector.broadcast %50 : vector<256x1xf32> to vector<256x128xf32>
      %52 = arith.subf %36, %51 : vector<256x128xf32>
      %53 = vector.broadcast %41 : vector<1x128xf32> to vector<256x128xf32>
      %54 = arith.mulf %52, %53 : vector<256x128xf32>
      %55 = arith.mulf %52, %54 : vector<256x128xf32>
      %cst_25 = arith.constant dense<0.000000e+00> : vector<256xf32>
      %56 = vector.multi_reduction <add>, %55, %cst_25 [1] : vector<256x128xf32> to vector<256xf32>
      %57 = vector.shape_cast %56 : vector<256xf32> to vector<256x1xf32>
      %cst_26 = arith.constant 0.020833334 : f32
      %58 = vector.broadcast %cst_26 : f32 to vector<256x1xf32>
      %59 = arith.mulf %57, %58 : vector<256x1xf32>
      %cst_27 = arith.constant 9.99999974E-6 : f32
      %60 = vector.broadcast %cst_27 : f32 to vector<256x1xf32>
      %61 = arith.addf %59, %60 : vector<256x1xf32>
      %62 = math.rsqrt %61 : vector<256x1xf32>
      %63 = vector.broadcast %62 : vector<256x1xf32> to vector<256x128xf32>
      %64 = arith.mulf %52, %63 : vector<256x128xf32>
      %65 = vector.broadcast %42 : vector<1x128xf32> to vector<256x128xf32>
      %66 = arith.mulf %64, %65 : vector<256x128xf32>
      %67 = vector.broadcast %43 : vector<1x128xf32> to vector<256x128xf32>
      %68 = arith.addf %66, %67 : vector<256x128xf32>
      %69 = vector.broadcast %44 : vector<1x128xf32> to vector<256x128xf32>
      %70 = arith.mulf %69, %68 : vector<256x128xf32>
      %71 = arith.addf %36, %70 : vector<256x128xf32>
      %c0_28 = arith.constant 0 : index
      %c0_29 = arith.constant 0 : index
      %72 = vector.load %arg8[%c0_28, %c0_29] : memref<256x128xf32, #tpu.memory_space<vmem>>, vector<256x128xf32>
      tpu.vector_store %arg8[%c0_28, %c0_29], %71 {strides = array<i32>} : memref<256x128xf32, #tpu.memory_space<vmem>>, vector<256x128xf32>,
      %cst_30 = arith.constant dense<0.000000e+00> : vector<256xf32>
      %73 = vector.multi_reduction <add>, %71, %cst_30 [1] : vector<256x128xf32> to vector<256xf32>
      %74 = vector.shape_cast %73 : vector<256xf32> to vector<256x1xf32>
      %cst_31 = arith.constant 0.020833334 : f32
      %75 = vector.broadcast %cst_31 : f32 to vector<256x1xf32>
      %76 = arith.mulf %74, %75 : vector<256x1xf32>
      %77 = vector.broadcast %76 : vector<256x1xf32> to vector<256x128xf32>
      %78 = arith.subf %71, %77 : vector<256x128xf32>
      %79 = vector.broadcast %41 : vector<1x128xf32> to vector<256x128xf32>
      %80 = arith.mulf %78, %79 : vector<256x128xf32>
      %81 = arith.mulf %78, %80 : vector<256x128xf32>
      %cst_32 = arith.constant dense<0.000000e+00> : vector<256xf32>
      %82 = vector.multi_reduction <add>, %81, %cst_32 [1] : vector<256x128xf32> to vector<256xf32>
      %83 = vector.shape_cast %82 : vector<256xf32> to vector<256x1xf32>
      %cst_33 = arith.constant 0.020833334 : f32
      %84 = vector.broadcast %cst_33 : f32 to vector<256x1xf32>
      %85 = arith.mulf %83, %84 : vector<256x1xf32>
      %cst_34 = arith.constant 9.99999974E-6 : f32
      %86 = vector.broadcast %cst_34 : f32 to vector<256x1xf32>
      %87 = arith.addf %85, %86 : vector<256x1xf32>
      %88 = math.rsqrt %87 : vector<256x1xf32>
      %89 = vector.broadcast %88 : vector<256x1xf32> to vector<256x128xf32>
      %90 = arith.mulf %78, %89 : vector<256x128xf32>
      %91 = vector.broadcast %45 : vector<1x128xf32> to vector<256x128xf32>
      %92 = arith.mulf %90, %91 : vector<256x128xf32>
      %93 = vector.broadcast %46 : vector<1x128xf32> to vector<256x128xf32>
      %94 = arith.addf %92, %93 : vector<256x128xf32>
      %95 = arith.truncf %94 : vector<256x128xf32> to vector<256x128xbf16>
      %c0_35 = arith.constant 0 : index
      %c0_36 = arith.constant 0 : index
      %96 = vector.load %arg9[%c0_35, %c0_36] : memref<256x128xbf16, #tpu.memory_space<vmem>>, vector<256x128xbf16>
      tpu.vector_store %arg9[%c0_35, %c0_36], %95 {strides = array<i32>} : memref<256x128xbf16, #tpu.memory_space<vmem>>, vector<256x128xbf16>,
      %cst_37 = arith.constant 0.000000e+00 : f32
      %97 = vector.broadcast %cst_37 : f32 to vector<256x128xf32>
      %c0_38 = arith.constant 0 : index
      %c0_39 = arith.constant 0 : index
      %98 = vector.load %arg7[%c0_38, %c0_39] : memref<256x128xf32, #tpu.memory_space<vmem>>, vector<256x128xf32>
      tpu.vector_store %arg7[%c0_38, %c0_39], %97 {strides = array<i32>} : memref<256x128xf32, #tpu.memory_space<vmem>>, vector<256x128xf32>,
    } else {
    }
    %c128_i32 = arith.constant 128 : i32
    %3 = arith.muli %arg1, %c128_i32 : i32
    %4 = tpu.assume_multiple %3, 128 : i32
    %c0 = arith.constant 0 : index
    %5 = arith.index_cast %4 : i32 to index
    %6 = vector.load %arg4[%c0, %5] : memref<1x256xf32, #tpu.memory_space<vmem>>, vector<1x128xf32>
    %c0_1 = arith.constant 0 : index
    %7 = arith.index_cast %4 : i32 to index
    %8 = vector.load %arg5[%c0_1, %7] : memref<128x256xbf16, #tpu.memory_space<vmem>>, vector<128x128xbf16>
    %9 = arith.index_cast %4 : i32 to index
    %c0_2 = arith.constant 0 : index
    %10 = vector.load %arg6[%9, %c0_2] : memref<256x128xbf16, #tpu.memory_space<vmem>>, vector<128x128xbf16>
    %c0_3 = arith.constant 0 : index
    %c0_4 = arith.constant 0 : index
    %11 = vector.load %arg9[%c0_3, %c0_4] : memref<256x128xbf16, #tpu.memory_space<vmem>>, vector<256x128xbf16>
    %cst = arith.constant dense<0.000000e+00> : vector<256x128xf32>
    %12 = tpu.matmul %11, %8, %cst {dimension_numbers = #tpu.dot_dimension_numbers<[1], [0], [0], [1], [0, 0, 1, 1], [], []>} : vector<256x128xbf16>, vector<128x128xbf16>, vector<256x128xf32> -> vector<256x128xf32>
    %13 = vector.broadcast %6 : vector<1x128xf32> to vector<256x128xf32>
    %14 = arith.addf %12, %13 : vector<256x128xf32>
    %15 = arith.mulf %14, %14 : vector<256x128xf32>
    %16 = arith.mulf %14, %15 : vector<256x128xf32>
    %cst_5 = arith.constant 4.471500e-02 : f32
    %17 = vector.broadcast %cst_5 : f32 to vector<256x128xf32>
    %18 = arith.mulf %17, %16 : vector<256x128xf32>
    %19 = arith.addf %14, %18 : vector<256x128xf32>
    %cst_6 = arith.constant 0.797884583 : f32
    %20 = vector.broadcast %cst_6 : f32 to vector<256x128xf32>
    %21 = arith.mulf %20, %19 : vector<256x128xf32>
    %22 = math.tanh %21 : vector<256x128xf32>
    %cst_7 = arith.constant 1.000000e+00 : f32
    %23 = vector.broadcast %cst_7 : f32 to vector<256x128xf32>
    %24 = arith.addf %23, %22 : vector<256x128xf32>
    %cst_8 = arith.constant 5.000000e-01 : f32
    %25 = vector.broadcast %cst_8 : f32 to vector<256x128xf32>
    %26 = arith.mulf %25, %24 : vector<256x128xf32>
    %27 = arith.mulf %14, %26 : vector<256x128xf32>
    %c0_9 = arith.constant 0 : index
    %c0_10 = arith.constant 0 : index
    %28 = vector.load %arg7[%c0_9, %c0_10] : memref<256x128xf32, #tpu.memory_space<vmem>>, vector<256x128xf32>
    %29 = arith.truncf %27 : vector<256x128xf32> to vector<256x128xbf16>
    %cst_11 = arith.constant dense<0.000000e+00> : vector<256x128xf32>
    %30 = tpu.matmul %29, %10, %cst_11 {dimension_numbers = #tpu.dot_dimension_numbers<[1], [0], [0], [1], [0, 0, 1, 1], [], []>} : vector<256x128xbf16>, vector<128x128xbf16>, vector<256x128xf32> -> vector<256x128xf32>
    %31 = arith.addf %28, %30 : vector<256x128xf32>
    %c0_12 = arith.constant 0 : index
    %c0_13 = arith.constant 0 : index
    %32 = vector.load %arg7[%c0_12, %c0_13] : memref<256x128xf32, #tpu.memory_space<vmem>>, vector<256x128xf32>
    tpu.vector_store %arg7[%c0_12, %c0_13], %31 {strides = array<i32>} : memref<256x128xf32, #tpu.memory_space<vmem>>, vector<256x128xf32>,
    %c1_i32 = arith.constant 1 : i32
    %33 = arith.cmpi eq, %arg1, %c1_i32 : i32
    %34 = arith.extui %33 : i1 to i32
    %c0_i32_14 = arith.constant 0 : i32
    %35 = arith.cmpi ne, %34, %c0_i32_14 : i32
    scf.if %35 {
      %c5 = arith.constant 5 : index
      %c0_15 = arith.constant 0 : index
      %36 = vector.load %arg3[%c5, %c0_15] : memref<8x128xf32, #tpu.memory_space<vmem>>, vector<1x128xf32>
      %c6 = arith.constant 6 : index
      %c0_16 = arith.constant 0 : index
      %37 = vector.load %arg3[%c6, %c0_16] : memref<8x128xf32, #tpu.memory_space<vmem>>, vector<1x128xf32>
      %c0_17 = arith.constant 0 : index
      %c0_18 = arith.constant 0 : index
      %38 = vector.load %arg8[%c0_17, %c0_18] : memref<256x128xf32, #tpu.memory_space<vmem>>, vector<256x128xf32>
      %c0_19 = arith.constant 0 : index
      %c0_20 = arith.constant 0 : index
      %39 = vector.load %arg7[%c0_19, %c0_20] : memref<256x128xf32, #tpu.memory_space<vmem>>, vector<256x128xf32>
      %40 = vector.broadcast %37 : vector<1x128xf32> to vector<256x128xf32>
      %41 = arith.addf %39, %40 : vector<256x128xf32>
      %42 = vector.broadcast %36 : vector<1x128xf32> to vector<256x128xf32>
      %43 = arith.mulf %42, %41 : vector<256x128xf32>
      %44 = arith.addf %38, %43 : vector<256x128xf32>
      %c0_21 = arith.constant 0 : index
      %c0_22 = arith.constant 0 : index
      %45 = vector.load %arg7[%c0_21, %c0_22] : memref<256x128xf32, #tpu.memory_space<vmem>>, vector<256x128xf32>
      tpu.vector_store %arg7[%c0_21, %c0_22], %44 {strides = array<i32>} : memref<256x128xf32, #tpu.memory_space<vmem>>, vector<256x128xf32>,
    } else {
    }
    return
  }
  func.func @transform_0(%arg0: i32, %arg1: i32) -> (i32, i32) {
    %c0_i32 = arith.constant 0 : i32
    %c0_i32_0 = arith.constant 0 : i32
    return %arg0, %c0_i32 : i32, i32
  }
  func.func @transform_1(%arg0: i32, %arg1: i32) -> (i32, i32) {
    %c0_i32 = arith.constant 0 : i32
    %c0_i32_0 = arith.constant 0 : i32
    %c0_i32_1 = arith.constant 0 : i32
    return %c0_i32, %c0_i32_0 : i32, i32
  }
  func.func @transform_2(%arg0: i32, %arg1: i32) -> (i32, i32) {
    %c0_i32 = arith.constant 0 : i32
    %c0_i32_0 = arith.constant 0 : i32
    %c0_i32_1 = arith.constant 0 : i32
    return %c0_i32, %c0_i32_0 : i32, i32
  }
  func.func @transform_3(%arg0: i32, %arg1: i32) -> (i32, i32) {
    %c0_i32 = arith.constant 0 : i32
    %c0_i32_0 = arith.constant 0 : i32
    %c0_i32_1 = arith.constant 0 : i32
    return %c0_i32, %c0_i32_0 : i32, i32
  }
  func.func @transform_4(%arg0: i32, %arg1: i32) -> (i32, i32) {
    %c0_i32 = arith.constant 0 : i32
    %c0_i32_0 = arith.constant 0 : i32
    %c0_i32_1 = arith.constant 0 : i32
    return %c0_i32, %c0_i32_0 : i32, i32
  }
  func.func @transform_5(%arg0: i32, %arg1: i32) -> (i32, i32) {
    %c0_i32 = arith.constant 0 : i32
    %c0_i32_0 = arith.constant 0 : i32
    return %arg0, %c0_i32 : i32, i32
  }
}

</mosaic_0001>

<llo_original>
// kernel: metaformer_block.1
$region0: #{metaformer_block.1}
  #allocation0 [shape = 'u32[]', space=smem, size = 0x4, offset = 0x4, fixed_abs, tag = 'smem constant byte address 0x4 - core index']
  #allocation1 [shape = 'u32[144,128]{1,0:T(1,128)}', space=vmem, size = 0x12000, scoped, tag = 'internal scratch']
  #allocation2 [shape = 'f32[256,128]{1,0:T(8,128)}', space=vmem, size = 0x20000, scoped, tag = 'scratch operand']
  #allocation3 [shape = 'bf16[256,128]{1,0:T(8,128)(2,1)}', space=vmem, size = 0x10000, scoped, tag = 'scratch operand']
  %s0 = inlined_call_operand.vmem [shape: f32[512,128], index: 0, kind: input, shape index: {}]
  %s1 = inlined_call_operand.vmem [shape: f32[8,128], index: 1, kind: input, shape index: {}]
  %s2 = inlined_call_operand.vmem [shape: f32[1,256], index: 2, kind: input, shape index: {}]
  %s3 = inlined_call_operand.vmem [shape: bf16[128,256], index: 3, kind: input, shape index: {}]
  %s4 = inlined_call_operand.vmem [shape: bf16[256,128], index: 4, kind: input, shape index: {}]
  %s5 = inlined_call_operand.hbm [shape: f32[512,128], index: 5, kind: output, shape index: {}]
  %s6 = sld [smem:[#allocation0]]
  $region61: #{metaformer_block.1} parent=0
    _
  %s8 = ssub.s32 1, %s6
  %s9 = scalar_select 0, %s8, %s6
  $region1: #{metaformer_block.1} parent=0
    #allocation4 [shape = 'u8[262144]{0}', space=vmem, size = 0x40000, scoped, tag = 'output window, operand 0']
    #allocation5 [shape = 's32[2]{0}', space=sflag, size = 0x8, scoped, tag = 'scoped memory for metaformer_block.1']
    %10 = vsyncpa [#allocation5], 0
    %s11 = scalar_lea.sflag [#allocation5], 1
    %12 = vsyncpa %s11, 0
    loop: start=0, step=1, limit=6
    $region2: #{metaformer_block.1} parent=1 // loop_pre_header
      _
    $region3: #{metaformer_block.1} parent=1 // loop_header
      %s14 = sphi 0, %s18
      %p15 = scmp.ge.s32.totalorder %s14, 6
      %s21 = sphi 0, %s33
      %s22 = sphi 0, %s29
      %s23 = sphi 0, %s21
      %s24 = sphi 0, %s22
      %s25 = sphi 0, %s23
      %s26 = sphi 0, %s24
      %s36 = sphi 0, %s38
      %s39 = sphi 0, %s36
      %s40 = sphi 0, %s39
      %s56 = sphi 0, %s40
      %s60 = sphi 0, %s60
      %s62 = sphi 0, %s60
      %s63 = sphi 0, %s62
      %s77 = sphi 0, %s63
      %s81 = sphi 0, %s81
      %s83 = sphi 0, %s81
      %s84 = sphi 0, %s83
      %s98 = sphi 0, %s84
      %s102 = sphi 0, %s102
      %s104 = sphi 0, %s102
      %s105 = sphi 0, %s104
      %s119 = sphi 0, %s105
      %s123 = sphi 0, %s123
      %s125 = sphi 0, %s123
      %s126 = sphi 0, %s125
      %s140 = sphi 0, %s126
      %s146 = sphi 0, %s148
      %s149 = sphi 0, %s146
      %s150 = sphi 0, %s149
      %s166 = sphi 0, %s150
    $region4: #{metaformer_block.1} parent=1 // loop_header_branch
      %17 = sbr.rel (%p15) target = $region8
    $region5: #{metaformer_block.1} parent=1 // loop_body
      %s19 = ssub.s32 %s14, 1
      %s20 = ssub.s32 %s14, 2
      %s27 = sadd.s32 1, %s22
      %p28 = scmp.ge.s32.totalorder %s27, 2
      %s29 = scalar_select %p28, 0, %s27
      %s30 = sadd.s32 1, %s21
      %s31 = scalar_select %p28, %s30, %s21
      %p32 = scmp.ge.s32.totalorder %s31, 2
      %s33 = scalar_select %p32, 0, %s31
      %s34 = ssub.s32 %s21, %s33
      %p35 = scmp.eq.s32.totalorder %s34, 0
      %s37 = sadd.s32 %s36, 1
      %s38 = scalar_select %p35, %s36, %s37
      %p41 = pneg %p35
      %p42 = scmp.eq.s32.totalorder %s14, 3
      %p43 = por %p41, %p42
      %p44 = scmp.ne.s32.totalorder %s36, %s39
      %p45 = scmp.eq.s32.totalorder %s14, 0
      %p46 = por %p44, %p45
      %p47 = scmp.ne.s32.totalorder %s36, %s39
      %p48 = scmp.eq.s32.totalorder %s19, 3
      %p49 = por %p47, %p48
      %p50 = scmp.ne.s32.totalorder %s39, %s40
      %p51 = scmp.eq.s32.totalorder %s19, 0
      %p52 = por %p50, %p51
      %p53 = scmp.ne.s32.totalorder %s39, %s40
      %p54 = scmp.eq.s32.totalorder %s20, 3
      %p55 = por %p53, %p54
      %p57 = scmp.ne.s32.totalorder %s40, %s56
      %p58 = scmp.eq.s32.totalorder %s20, 0
      %p59 = por %p57, %p58
      %s61 = sadd.s32 %s60, 1
      %p64 = scmp.eq.s32.totalorder %s14, 3
      %p65 = scmp.ne.s32.totalorder %s60, %s62
      %p66 = scmp.eq.s32.totalorder %s14, 0
      %p67 = por %p65, %p66
      %p68 = scmp.ne.s32.totalorder %s60, %s62
      %p69 = scmp.eq.s32.totalorder %s19, 3
      %p70 = por %p68, %p69
      %p71 = scmp.ne.s32.totalorder %s62, %s63
      %p72 = scmp.eq.s32.totalorder %s19, 0
      %p73 = por %p71, %p72
      %p74 = scmp.ne.s32.totalorder %s62, %s63
      %p75 = scmp.eq.s32.totalorder %s20, 3
      %p76 = por %p74, %p75
      %p78 = scmp.ne.s32.totalorder %s63, %s77
      %p79 = scmp.eq.s32.totalorder %s20, 0
      %p80 = por %p78, %p79
      %s82 = sadd.s32 %s81, 1
      %p85 = scmp.eq.s32.totalorder %s14, 3
      %p86 = scmp.ne.s32.totalorder %s81, %s83
      %p87 = scmp.eq.s32.totalorder %s14, 0
      %p88 = por %p86, %p87
      %p89 = scmp.ne.s32.totalorder %s81, %s83
      %p90 = scmp.eq.s32.totalorder %s19, 3
      %p91 = por %p89, %p90
      %p92 = scmp.ne.s32.totalorder %s83, %s84
      %p93 = scmp.eq.s32.totalorder %s19, 0
      %p94 = por %p92, %p93
      %p95 = scmp.ne.s32.totalorder %s83, %s84
      %p96 = scmp.eq.s32.totalorder %s20, 3
      %p97 = por %p95, %p96
      %p99 = scmp.ne.s32.totalorder %s84, %s98
      %p100 = scmp.eq.s32.totalorder %s20, 0
      %p101 = por %p99, %p100
      %s103 = sadd.s32 %s102, 1
      %p106 = scmp.eq.s32.totalorder %s14, 3
      %p107 = scmp.ne.s32.totalorder %s102, %s104
      %p108 = scmp.eq.s32.totalorder %s14, 0
      %p109 = por %p107, %p108
      %p110 = scmp.ne.s32.totalorder %s102, %s104
      %p111 = scmp.eq.s32.totalorder %s19, 3
      %p112 = por %p110, %p111
      %p113 = scmp.ne.s32.totalorder %s104, %s105
      %p114 = scmp.eq.s32.totalorder %s19, 0
      %p115 = por %p113, %p114
      %p116 = scmp.ne.s32.totalorder %s104, %s105
      %p117 = scmp.eq.s32.totalorder %s20, 3
      %p118 = por %p116, %p117
      %p120 = scmp.ne.s32.totalorder %s105, %s119
      %p121 = scmp.eq.s32.totalorder %s20, 0
      %p122 = por %p120, %p121
      %s124 = sadd.s32 %s123, 1
      %p127 = scmp.eq.s32.totalorder %s14, 3
      %p128 = scmp.ne.s32.totalorder %s123, %s125
      %p129 = scmp.eq.s32.totalorder %s14, 0
      %p130 = por %p128, %p129
      %p131 = scmp.ne.s32.totalorder %s123, %s125
      %p132 = scmp.eq.s32.totalorder %s19, 3
      %p133 = por %p131, %p132
      %p134 = scmp.ne.s32.totalorder %s125, %s126
      %p135 = scmp.eq.s32.totalorder %s19, 0
      %p136 = por %p134, %p135
      %p137 = scmp.ne.s32.totalorder %s125, %s126
      %p138 = scmp.eq.s32.totalorder %s20, 3
      %p139 = por %p137, %p138
      %p141 = scmp.ne.s32.totalorder %s126, %s140
      %p142 = scmp.eq.s32.totalorder %s20, 0
      %p143 = por %p141, %p142
      %s144 = ssub.s32 %s21, %s33
      %p145 = scmp.eq.s32.totalorder %s144, 0
      %s147 = sadd.s32 %s146, 1
      %s148 = scalar_select %p145, %s146, %s147
      %p151 = pneg %p145
      %p152 = scmp.eq.s32.totalorder %s14, 3
      %p153 = por %p151, %p152
      %p154 = scmp.ne.s32.totalorder %s146, %s149
      %p155 = scmp.eq.s32.totalorder %s14, 0
      %p156 = por %p154, %p155
      %p157 = scmp.ne.s32.totalorder %s146, %s149
      %p158 = scmp.eq.s32.totalorder %s19, 3
      %p159 = por %p157, %p158
      %p160 = scmp.ne.s32.totalorder %s149, %s150
      %p161 = scmp.eq.s32.totalorder %s19, 0
      %p162 = por %p160, %p161
      %p163 = scmp.ne.s32.totalorder %s149, %s150
      %p164 = scmp.eq.s32.totalorder %s20, 3
      %p165 = por %p163, %p164
      %p167 = scmp.ne.s32.totalorder %s150, %s166
      %p168 = scmp.eq.s32.totalorder %s20, 0
      %p169 = por %p167, %p168
      %p170 = scmp.le.s32.totalorder 1, %s14
      %p171 = scmp.lt.s32.totalorder %s14, 5
      %p172 = pnand %p170, %p171
      %p173 = pneg %p172
      // Predicated region
      $region9: #{metaformer_block.1} parent=5 // pred_check
        _
      $region10: #{metaformer_block.1} parent=5 // pred_check_branch
        %175 = sbr.rel (%p172) target = $region12
      $region11: #{metaformer_block.1} parent=5 // pred_region
        %s176 = ssub.s32 %s14, 1
        // Predicated region
        $region13: #{metaformer_block.1} parent=11 // pred_check
          %p177 = pneg %p73
        $region14: #{metaformer_block.1} parent=11 // pred_check_branch
          %179 = sbr.rel (%p177) target = $region16
        $region15: #{metaformer_block.1} parent=11 // pred_region
          _
        $region16: #{metaformer_block.1} parent=11 // pred_fallthru
          _
        // Predicated region
        $region17: #{metaformer_block.1} parent=11 // pred_check
          %p180 = pneg %p94
        $region18: #{metaformer_block.1} parent=11 // pred_check_branch
          %182 = sbr.rel (%p180) target = $region20
        $region19: #{metaformer_block.1} parent=11 // pred_region
          _
        $region20: #{metaformer_block.1} parent=11 // pred_fallthru
          _
        // Predicated region
        $region21: #{metaformer_block.1} parent=11 // pred_check
          %p183 = pneg %p115
        $region22: #{metaformer_block.1} parent=11 // pred_check_branch
          %185 = sbr.rel (%p183) target = $region24
        $region23: #{metaformer_block.1} parent=11 // pred_region
          _
        $region24: #{metaformer_block.1} parent=11 // pred_fallthru
          _
        // Predicated region
        $region25: #{metaformer_block.1} parent=11 // pred_check
          %p186 = pneg %p136
        $region26: #{metaformer_block.1} parent=11 // pred_check_branch
          %188 = sbr.rel (%p186) target = $region28
        $region27: #{metaformer_block.1} parent=11 // pred_region
          _
        $region28: #{metaformer_block.1} parent=11 // pred_fallthru
          _
      $region12: #{metaformer_block.1} parent=5 // pred_fallthru
        _
      %p189 = scmp.lt.s32.totalorder %s14, 4
      // Predicated region
      $region29: #{metaformer_block.1} parent=5 // pred_check
        %p190 = pneg %p189
      $region30: #{metaformer_block.1} parent=5 // pred_check_branch
        %192 = sbr.rel (%p190) target = $region32
      $region31: #{metaformer_block.1} parent=5 // pred_region
        // Predicated region
        $region33: #{metaformer_block.1} parent=31 // pred_check
          %p193 = pneg %p46
        $region34: #{metaformer_block.1} parent=31 // pred_check_branch
          %195 = sbr.rel (%p193) target = $region36
        $region35: #{metaformer_block.1} parent=31 // pred_region
          %s196 = smul.u32 32, %s21
          %p197 = scmp.lt.s32.totalorder %s196, 63
          %s198 = scalar_select %p197, %s196, 63
          %s199 = smul.addr %s198, 8
          %s200 = scalar_lea.vmem %s0, %s199
          %s201 = smul.u32 32, %s21
        $region36: #{metaformer_block.1} parent=31 // pred_fallthru
          _
      $region32: #{metaformer_block.1} parent=5 // pred_fallthru
        _
      %p202 = scmp.le.s32.totalorder 1, %s14
      %p203 = scmp.lt.s32.totalorder %s14, 5
      %p204 = pnand %p202, %p203
      %p205 = pneg %p204
      // Predicated region
      $region37: #{metaformer_block.1} parent=5 // pred_check
        _
      $region38: #{metaformer_block.1} parent=5 // pred_check_branch
        %207 = sbr.rel (%p204) target = $region40
      $region39: #{metaformer_block.1} parent=5 // pred_region
        %s208 = ssub.s32 %s14, 1
        %s209 = smul.u32 32, %s23
        %p210 = scmp.lt.s32.totalorder %s209, 63
        %s211 = scalar_select %p210, %s209, 63
        %s212 = smul.addr %s211, 8
        %s213 = scalar_lea.vmem %s0, %s212
        %p214 = pneg %p52
        %p215 = pneg %p49
        %p216 = pneg %p73
        %p217 = pneg %p70
        %p218 = pneg %p94
        %p219 = pneg %p91
        %p220 = pneg %p115
        %p221 = pneg %p112
        %p222 = pneg %p136
        %p223 = pneg %p133
        %p224 = pneg %p162
        %p225 = pneg %p159
        %s226 = sand.u32 %s149, 1
        %s227 = scalar_lea.sflag [#allocation5], %s226
        %s228 = sand.u32 %s149, 1
        %s229 = smul.addr %s228, 256
        %s230 = scalar_lea.vmem [#allocation4], %s229
        %s231 = smul.u32 32, %s23
        %p232 = scmp.lt.s32.totalorder %s231, 63
        %s233 = scalar_select %p232, %s231, 63
        %s234 = smul.addr %s233, 8
        %s235 = scalar_lea.vmem %s0, %s234
        %s236 = smul.u32 32, %s23
        %s237 = smul.u32 32, %s23
        %p239 = scmp.eq.s32.totalorder %s24, 0
        // Predicated region
        $region41: #{metaformer_block.1} parent=39 // pred_check
          %p240 = pneg %p239
        $region42: #{metaformer_block.1} parent=39 // pred_check_branch
          %242 = sbr.rel (%p240) target = $region44
        $region43: #{metaformer_block.1} parent=39 // pred_region
          %v243 = vld [vmem:[%s235] sm:$0xff]
          %v244 = vld [vmem:[%s235 + $0x8] sm:$0xff]
          %v245 = vld [vmem:[%s235 + $0x10] sm:$0xff]
          %v246 = vld [vmem:[%s235 + $0x18] sm:$0xff]
          %v247 = vld [vmem:[%s235 + $0x20] sm:$0xff]
          %v248 = vld [vmem:[%s235 + $0x28] sm:$0xff]
          %v249 = vld [vmem:[%s235 + $0x30] sm:$0xff]
          %v250 = vld [vmem:[%s235 + $0x38] sm:$0xff]
          %v251 = vld [vmem:[%s235 + $0x40] sm:$0xff]
          %v252 = vld [vmem:[%s235 + $0x48] sm:$0xff]
          %v253 = vld [vmem:[%s235 + $0x50] sm:$0xff]
          %v254 = vld [vmem:[%s235 + $0x58] sm:$0xff]
          %v255 = vld [vmem:[%s235 + $0x60] sm:$0xff]
          %v256 = vld [vmem:[%s235 + $0x68] sm:$0xff]
          %v257 = vld [vmem:[%s235 + $0x70] sm:$0xff]
          %v258 = vld [vmem:[%s235 + $0x78] sm:$0xff]
          %v259 = vld [vmem:[%s235 + $0x80] sm:$0xff]
          %v260 = vld [vmem:[%s235 + $0x88] sm:$0xff]
          %v261 = vld [vmem:[%s235 + $0x90] sm:$0xff]
          %v262 = vld [vmem:[%s235 + $0x98] sm:$0xff]
          %v263 = vld [vmem:[%s235 + $0xa0] sm:$0xff]
          %v264 = vld [vmem:[%s235 + $0xa8] sm:$0xff]
          %v265 = vld [vmem:[%s235 + $0xb0] sm:$0xff]
          %v266 = vld [vmem:[%s235 + $0xb8] sm:$0xff]
          %v267 = vld [vmem:[%s235 + $0xc0] sm:$0xff]
          %v268 = vld [vmem:[%s235 + $0xc8] sm:$0xff]
          %v269 = vld [vmem:[%s235 + $0xd0] sm:$0xff]
          %v270 = vld [vmem:[%s235 + $0xd8] sm:$0xff]
          %v271 = vld [vmem:[%s235 + $0xe0] sm:$0xff]
          %v272 = vld [vmem:[%s235 + $0xe8] sm:$0xff]
          %v273 = vld [vmem:[%s235 + $0xf0] sm:$0xff]
          %v274 = vld [vmem:[%s235 + $0xf8] sm:$0xff]
          %v275 = vlaneseq
          %v276 = vand.u32 %v275, 127
          %vm277 = vcmp.lt.s32.totalorder %v276, 48
          %v278 = vsel %vm277, 1, 0
          %v279 = vcvt.s32.f32 %v278
          %v280 = vld [vmem:[%s1] sm:$0x1]
          %v281 = vld [vmem:[%s1 + $0x1] sm:$0x1]
          %v282 = vld [vmem:[%s1 + $0x2] sm:$0x1]
          %v283 = vld [vmem:[%s1 + $0x3] sm:$0x1]
          %v284 = vld [vmem:[%s1 + $0x4] sm:$0x1]
          %285 = vadd.xlane.f32.xlu0 %v243
          %v286 = vpop.xlane.xlu0 %285
          %287 = vadd.xlane.f32.xlu0 %v244
          %v288 = vpop.xlane.xlu0 %287
          %289 = vadd.xlane.f32.xlu0 %v245
          %v290 = vpop.xlane.xlu0 %289
          %291 = vadd.xlane.f32.xlu0 %v246
          %v292 = vpop.xlane.xlu0 %291
          %293 = vadd.xlane.f32.xlu0 %v247
          %v294 = vpop.xlane.xlu0 %293
          %295 = vadd.xlane.f32.xlu0 %v248
          %v296 = vpop.xlane.xlu0 %295
          %297 = vadd.xlane.f32.xlu0 %v249
          %v298 = vpop.xlane.xlu0 %297
          %299 = vadd.xlane.f32.xlu0 %v250
          %v300 = vpop.xlane.xlu0 %299
          %301 = vadd.xlane.f32.xlu0 %v251
          %v302 = vpop.xlane.xlu0 %301
          %303 = vadd.xlane.f32.xlu0 %v252
          %v304 = vpop.xlane.xlu0 %303
          %305 = vadd.xlane.f32.xlu0 %v253
          %v306 = vpop.xlane.xlu0 %305
          %307 = vadd.xlane.f32.xlu0 %v254
          %v308 = vpop.xlane.xlu0 %307
          %309 = vadd.xlane.f32.xlu0 %v255
          %v310 = vpop.xlane.xlu0 %309
          %311 = vadd.xlane.f32.xlu0 %v256
          %v312 = vpop.xlane.xlu0 %311
          %313 = vadd.xlane.f32.xlu0 %v257
          %v314 = vpop.xlane.xlu0 %313
          %315 = vadd.xlane.f32.xlu0 %v258
          %v316 = vpop.xlane.xlu0 %315
          %317 = vadd.xlane.f32.xlu0 %v259
          %v318 = vpop.xlane.xlu0 %317
          %319 = vadd.xlane.f32.xlu0 %v260
          %v320 = vpop.xlane.xlu0 %319
          %321 = vadd.xlane.f32.xlu0 %v261
          %v322 = vpop.xlane.xlu0 %321
          %323 = vadd.xlane.f32.xlu0 %v262
          %v324 = vpop.xlane.xlu0 %323
          %325 = vadd.xlane.f32.xlu0 %v263
          %v326 = vpop.xlane.xlu0 %325
          %327 = vadd.xlane.f32.xlu0 %v264
          %v328 = vpop.xlane.xlu0 %327
          %329 = vadd.xlane.f32.xlu0 %v265
          %v330 = vpop.xlane.xlu0 %329
          %331 = vadd.xlane.f32.xlu0 %v266
          %v332 = vpop.xlane.xlu0 %331
          %333 = vadd.xlane.f32.xlu0 %v267
          %v334 = vpop.xlane.xlu0 %333
          %335 = vadd.xlane.f32.xlu0 %v268
          %v336 = vpop.xlane.xlu0 %335
          %337 = vadd.xlane.f32.xlu0 %v269
          %v338 = vpop.xlane.xlu0 %337
          %339 = vadd.xlane.f32.xlu0 %v270
          %v340 = vpop.xlane.xlu0 %339
          %341 = vadd.xlane.f32.xlu0 %v271
          %v342 = vpop.xlane.xlu0 %341
          %343 = vadd.xlane.f32.xlu0 %v272
          %v344 = vpop.xlane.xlu0 %343
          %345 = vadd.xlane.f32.xlu0 %v273
          %v346 = vpop.xlane.xlu0 %345
          %347 = vadd.xlane.f32.xlu0 %v274
          %v348 = vpop.xlane.xlu0 %347
          %v349 = vmul.f32 %v286, 0.020833334
          %v350 = vmul.f32 %v288, 0.020833334
          %v351 = vmul.f32 %v290, 0.020833334
          %v352 = vmul.f32 %v292, 0.020833334
          %v353 = vmul.f32 %v294, 0.020833334
          %v354 = vmul.f32 %v296, 0.020833334
          %v355 = vmul.f32 %v298, 0.020833334
          %v356 = vmul.f32 %v300, 0.020833334
          %v357 = vmul.f32 %v302, 0.020833334
          %v358 = vmul.f32 %v304, 0.020833334
          %v359 = vmul.f32 %v306, 0.020833334
          %v360 = vmul.f32 %v308, 0.020833334
          %v361 = vmul.f32 %v310, 0.020833334
          %v362 = vmul.f32 %v312, 0.020833334
          %v363 = vmul.f32 %v314, 0.020833334
          %v364 = vmul.f32 %v316, 0.020833334
          %v365 = vmul.f32 %v318, 0.020833334
          %v366 = vmul.f32 %v320, 0.020833334
          %v367 = vmul.f32 %v322, 0.020833334
          %v368 = vmul.f32 %v324, 0.020833334
          %v369 = vmul.f32 %v326, 0.020833334
          %v370 = vmul.f32 %v328, 0.020833334
          %v371 = vmul.f32 %v330, 0.020833334
          %v372 = vmul.f32 %v332, 0.020833334
          %v373 = vmul.f32 %v334, 0.020833334
          %v374 = vmul.f32 %v336, 0.020833334
          %v375 = vmul.f32 %v338, 0.020833334
          %v376 = vmul.f32 %v340, 0.020833334
          %v377 = vmul.f32 %v342, 0.020833334
          %v378 = vmul.f32 %v344, 0.020833334
          %v379 = vmul.f32 %v346, 0.020833334
          %v380 = vmul.f32 %v348, 0.020833334
          %v381 = vsub.f32 %v243, %v349
          %v382 = vsub.f32 %v244, %v350
          %v383 = vsub.f32 %v245, %v351
          %v384 = vsub.f32 %v246, %v352
          %v385 = vsub.f32 %v247, %v353
          %v386 = vsub.f32 %v248, %v354
          %v387 = vsub.f32 %v249, %v355
          %v388 = vsub.f32 %v250, %v356
          %v389 = vsub.f32 %v251, %v357
          %v390 = vsub.f32 %v252, %v358
          %v391 = vsub.f32 %v253, %v359
          %v392 = vsub.f32 %v254, %v360
          %v393 = vsub.f32 %v255, %v361
          %v394 = vsub.f32 %v256, %v362
          %v395 = vsub.f32 %v257, %v363
          %v396 = vsub.f32 %v258, %v364
          %v397 = vsub.f32 %v259, %v365
          %v398 = vsub.f32 %v260, %v366
          %v399 = vsub.f32 %v261, %v367
          %v400 = vsub.f32 %v262, %v368
          %v401 = vsub.f32 %v263, %v369
          %v402 = vsub.f32 %v264, %v370
          %v403 = vsub.f32 %v265, %v371
          %v404 = vsub.f32 %v266, %v372
          %v405 = vsub.f32 %v267, %v373
          %v406 = vsub.f32 %v268, %v374
          %v407 = vsub.f32 %v269, %v375
          %v408 = vsub.f32 %v270, %v376
          %v409 = vsub.f32 %v271, %v377
          %v410 = vsub.f32 %v272, %v378
          %v411 = vsub.f32 %v273, %v379
          %v412 = vsub.f32 %v274, %v380
          %v413 = vmul.f32 %v381, %v279
          %v414 = vmul.f32 %v382, %v279
          %v415 = vmul.f32 %v383, %v279
          %v416 = vmul.f32 %v384, %v279
          %v417 = vmul.f32 %v385, %v279
          %v418 = vmul.f32 %v386, %v279
          %v419 = vmul.f32 %v387, %v279
          %v420 = vmul.f32 %v388, %v279
          %v421 = vmul.f32 %v389, %v279
          %v422 = vmul.f32 %v390, %v279
          %v423 = vmul.f32 %v391, %v279
          %v424 = vmul.f32 %v392, %v279
          %v425 = vmul.f32 %v393, %v279
          %v426 = vmul.f32 %v394, %v279
          %v427 = vmul.f32 %v395, %v279
          %v428 = vmul.f32 %v396, %v279
          %v429 = vmul.f32 %v397, %v279
          %v430 = vmul.f32 %v398, %v279
          %v431 = vmul.f32 %v399, %v279
          %v432 = vmul.f32 %v400, %v279
          %v433 = vmul.f32 %v401, %v279
          %v434 = vmul.f32 %v402, %v279
          %v435 = vmul.f32 %v403, %v279
          %v436 = vmul.f32 %v404, %v279
          %v437 = vmul.f32 %v405, %v279
          %v438 = vmul.f32 %v406, %v279
          %v439 = vmul.f32 %v407, %v279
          %v440 = vmul.f32 %v408, %v279
          %v441 = vmul.f32 %v409, %v279
          %v442 = vmul.f32 %v410, %v279
          %v443 = vmul.f32 %v411, %v279
          %v444 = vmul.f32 %v412, %v279
          %v445 = vmul.f32 %v381, %v413
          %v446 = vmul.f32 %v382, %v414
          %v447 = vmul.f32 %v383, %v415
          %v448 = vmul.f32 %v384, %v416
          %v449 = vmul.f32 %v385, %v417
          %v450 = vmul.f32 %v386, %v418
          %v451 = vmul.f32 %v387, %v419
          %v452 = vmul.f32 %v388, %v420
          %v453 = vmul.f32 %v389, %v421
          %v454 = vmul.f32 %v390, %v422
          %v455 = vmul.f32 %v391, %v423
          %v456 = vmul.f32 %v392, %v424
          %v457 = vmul.f32 %v393, %v425
          %v458 = vmul.f32 %v394, %v426
          %v459 = vmul.f32 %v395, %v427
          %v460 = vmul.f32 %v396, %v428
          %v461 = vmul.f32 %v397, %v429
          %v462 = vmul.f32 %v398, %v430
          %v463 = vmul.f32 %v399, %v431
          %v464 = vmul.f32 %v400, %v432
          %v465 = vmul.f32 %v401, %v433
          %v466 = vmul.f32 %v402, %v434
          %v467 = vmul.f32 %v403, %v435
          %v468 = vmul.f32 %v404, %v436
          %v469 = vmul.f32 %v405, %v437
          %v470 = vmul.f32 %v406, %v438
          %v471 = vmul.f32 %v407, %v439
          %v472 = vmul.f32 %v408, %v440
          %v473 = vmul.f32 %v409, %v441
          %v474 = vmul.f32 %v410, %v442
          %v475 = vmul.f32 %v411, %v443
          %v476 = vmul.f32 %v412, %v444
          %477 = vadd.xlane.f32.xlu0 %v445
          %v478 = vpop.xlane.xlu0 %477
          %479 = vadd.xlane.f32.xlu0 %v446
          %v480 = vpop.xlane.xlu0 %479
          %481 = vadd.xlane.f32.xlu0 %v447
          %v482 = vpop.xlane.xlu0 %481
          %483 = vadd.xlane.f32.xlu0 %v448
          %v484 = vpop.xlane.xlu0 %483
          %485 = vadd.xlane.f32.xlu0 %v449
          %v486 = vpop.xlane.xlu0 %485
          %487 = vadd.xlane.f32.xlu0 %v450
          %v488 = vpop.xlane.xlu0 %487
          %489 = vadd.xlane.f32.xlu0 %v451
          %v490 = vpop.xlane.xlu0 %489
          %491 = vadd.xlane.f32.xlu0 %v452
          %v492 = vpop.xlane.xlu0 %491
          %493 = vadd.xlane.f32.xlu0 %v453
          %v494 = vpop.xlane.xlu0 %493
          %495 = vadd.xlane.f32.xlu0 %v454
          %v496 = vpop.xlane.xlu0 %495
          %497 = vadd.xlane.f32.xlu0 %v455
          %v498 = vpop.xlane.xlu0 %497
          %499 = vadd.xlane.f32.xlu0 %v456
          %v500 = vpop.xlane.xlu0 %499
          %501 = vadd.xlane.f32.xlu0 %v457
          %v502 = vpop.xlane.xlu0 %501
          %503 = vadd.xlane.f32.xlu0 %v458
          %v504 = vpop.xlane.xlu0 %503
          %505 = vadd.xlane.f32.xlu0 %v459
          %v506 = vpop.xlane.xlu0 %505
          %507 = vadd.xlane.f32.xlu0 %v460
          %v508 = vpop.xlane.xlu0 %507
          %509 = vadd.xlane.f32.xlu0 %v461
          %v510 = vpop.xlane.xlu0 %509
          %511 = vadd.xlane.f32.xlu0 %v462
          %v512 = vpop.xlane.xlu0 %511
          %513 = vadd.xlane.f32.xlu0 %v463
          %v514 = vpop.xlane.xlu0 %513
          %515 = vadd.xlane.f32.xlu0 %v464
          %v516 = vpop.xlane.xlu0 %515
          %517 = vadd.xlane.f32.xlu0 %v465
          %v518 = vpop.xlane.xlu0 %517
          %519 = vadd.xlane.f32.xlu0 %v466
          %v520 = vpop.xlane.xlu0 %519
          %521 = vadd.xlane.f32.xlu0 %v467
          %v522 = vpop.xlane.xlu0 %521
          %523 = vadd.xlane.f32.xlu0 %v468
          %v524 = vpop.xlane.xlu0 %523
          %525 = vadd.xlane.f32.xlu0 %v469
          %v526 = vpop.xlane.xlu0 %525
          %527 = vadd.xlane.f32.xlu0 %v470
          %v528 = vpop.xlane.xlu0 %527
          %529 = vadd.xlane.f32.xlu0 %v471
          %v530 = vpop.xlane.xlu0 %529
          %531 = vadd.xlane.f32.xlu0 %v472
          %v532 = vpop.xlane.xlu0 %531
          %533 = vadd.xlane.f32.xlu0 %v473
          %v534 = vpop.xlane.xlu0 %533
          %535 = vadd.xlane.f32.xlu0 %v474
          %v536 = vpop.xlane.xlu0 %535
          %537 = vadd.xlane.f32.xlu0 %v475
          %v538 = vpop.xlane.xlu0 %537
          %539 = vadd.xlane.f32.xlu0 %v476
          %v540 = vpop.xlane.xlu0 %539
          %v541 = vmul.f32 %v478, 0.020833334
          %v542 = vmul.f32 %v480, 0.020833334
          %v543 = vmul.f32 %v482, 0.020833334
          %v544 = vmul.f32 %v484, 0.020833334
          %v545 = vmul.f32 %v486, 0.020833334
          %v546 = vmul.f32 %v488, 0.020833334
          %v547 = vmul.f32 %v490, 0.020833334
          %v548 = vmul.f32 %v492, 0.020833334
          %v549 = vmul.f32 %v494, 0.020833334
          %v550 = vmul.f32 %v496, 0.020833334
          %v551 = vmul.f32 %v498, 0.020833334
          %v552 = vmul.f32 %v500, 0.020833334
          %v553 = vmul.f32 %v502, 0.020833334
          %v554 = vmul.f32 %v504, 0.020833334
          %v555 = vmul.f32 %v506, 0.020833334
          %v556 = vmul.f32 %v508, 0.020833334
          %v557 = vmul.f32 %v510, 0.020833334
          %v558 = vmul.f32 %v512, 0.020833334
          %v559 = vmul.f32 %v514, 0.020833334
          %v560 = vmul.f32 %v516, 0.020833334
          %v561 = vmul.f32 %v518, 0.020833334
          %v562 = vmul.f32 %v520, 0.020833334
          %v563 = vmul.f32 %v522, 0.020833334
          %v564 = vmul.f32 %v524, 0.020833334
          %v565 = vmul.f32 %v526, 0.020833334
          %v566 = vmul.f32 %v528, 0.020833334
          %v567 = vmul.f32 %v530, 0.020833334
          %v568 = vmul.f32 %v532, 0.020833334
          %v569 = vmul.f32 %v534, 0.020833334
          %v570 = vmul.f32 %v536, 0.020833334
          %v571 = vmul.f32 %v538, 0.020833334
          %v572 = vmul.f32 %v540, 0.020833334
          %v573 = vadd.f32 %v541, 1e-05
          %v574 = vadd.f32 %v542, 1e-05
          %v575 = vadd.f32 %v543, 1e-05
          %v576 = vadd.f32 %v544, 1e-05
          %v577 = vadd.f32 %v545, 1e-05
          %v578 = vadd.f32 %v546, 1e-05
          %v579 = vadd.f32 %v547, 1e-05
          %v580 = vadd.f32 %v548, 1e-05
          %v581 = vadd.f32 %v549, 1e-05
          %v582 = vadd.f32 %v550, 1e-05
          %v583 = vadd.f32 %v551, 1e-05
          %v584 = vadd.f32 %v552, 1e-05
          %v585 = vadd.f32 %v553, 1e-05
          %v586 = vadd.f32 %v554, 1e-05
          %v587 = vadd.f32 %v555, 1e-05
          %v588 = vadd.f32 %v556, 1e-05
          %v589 = vadd.f32 %v557, 1e-05
          %v590 = vadd.f32 %v558, 1e-05
          %v591 = vadd.f32 %v559, 1e-05
          %v592 = vadd.f32 %v560, 1e-05
          %v593 = vadd.f32 %v561, 1e-05
          %v594 = vadd.f32 %v562, 1e-05
          %v595 = vadd.f32 %v563, 1e-05
          %v596 = vadd.f32 %v564, 1e-05
          %v597 = vadd.f32 %v565, 1e-05
          %v598 = vadd.f32 %v566, 1e-05
          %v599 = vadd.f32 %v567, 1e-05
          %v600 = vadd.f32 %v568, 1e-05
          %v601 = vadd.f32 %v569, 1e-05
          %v602 = vadd.f32 %v570, 1e-05
          %v603 = vadd.f32 %v571, 1e-05
          %v604 = vadd.f32 %v572, 1e-05
          %v605 = vrsqrt.pop %v573
          %v606 = vrsqrt.pop %v574
          %v607 = vrsqrt.pop %v575
          %v608 = vrsqrt.pop %v576
          %v609 = vrsqrt.pop %v577
          %v610 = vrsqrt.pop %v578
          %v611 = vrsqrt.pop %v579
          %v612 = vrsqrt.pop %v580
          %v613 = vrsqrt.pop %v581
          %v614 = vrsqrt.pop %v582
          %v615 = vrsqrt.pop %v583
          %v616 = vrsqrt.pop %v584
          %v617 = vrsqrt.pop %v585
          %v618 = vrsqrt.pop %v586
          %v619 = vrsqrt.pop %v587
          %v620 = vrsqrt.pop %v588
          %v621 = vrsqrt.pop %v589
          %v622 = vrsqrt.pop %v590
          %v623 = vrsqrt.pop %v591
          %v624 = vrsqrt.pop %v592
          %v625 = vrsqrt.pop %v593
          %v626 = vrsqrt.pop %v594
          %v627 = vrsqrt.pop %v595
          %v628 = vrsqrt.pop %v596
          %v629 = vrsqrt.pop %v597
          %v630 = vrsqrt.pop %v598
          %v631 = vrsqrt.pop %v599
          %v632 = vrsqrt.pop %v600
          %v633 = vrsqrt.pop %v601
          %v634 = vrsqrt.pop %v602
          %v635 = vrsqrt.pop %v603
          %v636 = vrsqrt.pop %v604
          %v637 = vmul.f32 %v381, %v605
          %v638 = vmul.f32 %v382, %v606
          %v639 = vmul.f32 %v383, %v607
          %v640 = vmul.f32 %v384, %v608
          %v641 = vmul.f32 %v385, %v609
          %v642 = vmul.f32 %v386, %v610
          %v643 = vmul.f32 %v387, %v611
          %v644 = vmul.f32 %v388, %v612
          %v645 = vmul.f32 %v389, %v613
          %v646 = vmul.f32 %v390, %v614
          %v647 = vmul.f32 %v391, %v615
          %v648 = vmul.f32 %v392, %v616
          %v649 = vmul.f32 %v393, %v617
          %v650 = vmul.f32 %v394, %v618
          %v651 = vmul.f32 %v395, %v619
          %v652 = vmul.f32 %v396, %v620
          %v653 = vmul.f32 %v397, %v621
          %v654 = vmul.f32 %v398, %v622
          %v655 = vmul.f32 %v399, %v623
          %v656 = vmul.f32 %v400, %v624
          %v657 = vmul.f32 %v401, %v625
          %v658 = vmul.f32 %v402, %v626
          %v659 = vmul.f32 %v403, %v627
          %v660 = vmul.f32 %v404, %v628
          %v661 = vmul.f32 %v405, %v629
          %v662 = vmul.f32 %v406, %v630
          %v663 = vmul.f32 %v407, %v631
          %v664 = vmul.f32 %v408, %v632
          %v665 = vmul.f32 %v409, %v633
          %v666 = vmul.f32 %v410, %v634
          %v667 = vmul.f32 %v411, %v635
          %v668 = vmul.f32 %v412, %v636
          %v669 = vlaneseq
          %v670 = vshrl.u32 %v669, 7
          %v671 = vsub.s32 0, %v670
          %v672 = vrot.slane %v280, %v671
          %v673 = vmul.f32 %v637, %v672
          %v674 = vmul.f32 %v638, %v672
          %v675 = vmul.f32 %v639, %v672
          %v676 = vmul.f32 %v640, %v672
          %v677 = vmul.f32 %v641, %v672
          %v678 = vmul.f32 %v642, %v672
          %v679 = vmul.f32 %v643, %v672
          %v680 = vmul.f32 %v644, %v672
          %v681 = vmul.f32 %v645, %v672
          %v682 = vmul.f32 %v646, %v672
          %v683 = vmul.f32 %v647, %v672
          %v684 = vmul.f32 %v648, %v672
          %v685 = vmul.f32 %v649, %v672
          %v686 = vmul.f32 %v650, %v672
          %v687 = vmul.f32 %v651, %v672
          %v688 = vmul.f32 %v652, %v672
          %v689 = vmul.f32 %v653, %v672
          %v690 = vmul.f32 %v654, %v672
          %v691 = vmul.f32 %v655, %v672
          %v692 = vmul.f32 %v656, %v672
          %v693 = vmul.f32 %v657, %v672
          %v694 = vmul.f32 %v658, %v672
          %v695 = vmul.f32 %v659, %v672
          %v696 = vmul.f32 %v660, %v672
          %v697 = vmul.f32 %v661, %v672
          %v698 = vmul.f32 %v662, %v672
          %v699 = vmul.f32 %v663, %v672
          %v700 = vmul.f32 %v664, %v672
          %v701 = vmul.f32 %v665, %v672
          %v702 = vmul.f32 %v666, %v672
          %v703 = vmul.f32 %v667, %v672
          %v704 = vmul.f32 %v668, %v672
          %v705 = vlaneseq
          %v706 = vshrl.u32 %v705, 7
          %v707 = vsub.s32 0, %v706
          %v708 = vrot.slane %v281, %v707
          %v709 = vadd.f32 %v673, %v708
          %v710 = vadd.f32 %v674, %v708
          %v711 = vadd.f32 %v675, %v708
          %v712 = vadd.f32 %v676, %v708
          %v713 = vadd.f32 %v677, %v708
          %v714 = vadd.f32 %v678, %v708
          %v715 = vadd.f32 %v679, %v708
          %v716 = vadd.f32 %v680, %v708
          %v717 = vadd.f32 %v681, %v708
          %v718 = vadd.f32 %v682, %v708
          %v719 = vadd.f32 %v683, %v708
          %v720 = vadd.f32 %v684, %v708
          %v721 = vadd.f32 %v685, %v708
          %v722 = vadd.f32 %v686, %v708
          %v723 = vadd.f32 %v687, %v708
          %v724 = vadd.f32 %v688, %v708
          %v725 = vadd.f32 %v689, %v708
          %v726 = vadd.f32 %v690, %v708
          %v727 = vadd.f32 %v691, %v708
          %v728 = vadd.f32 %v692, %v708
          %v729 = vadd.f32 %v693, %v708
          %v730 = vadd.f32 %v694, %v708
          %v731 = vadd.f32 %v695, %v708
          %v732 = vadd.f32 %v696, %v708
          %v733 = vadd.f32 %v697, %v708
          %v734 = vadd.f32 %v698, %v708
          %v735 = vadd.f32 %v699, %v708
          %v736 = vadd.f32 %v700, %v708
          %v737 = vadd.f32 %v701, %v708
          %v738 = vadd.f32 %v702, %v708
          %v739 = vadd.f32 %v703, %v708
          %v740 = vadd.f32 %v704, %v708
          %v741 = vlaneseq
          %v742 = vshrl.u32 %v741, 7
          %v743 = vsub.s32 0, %v742
          %v744 = vrot.slane %v282, %v743
          %v745 = vmul.f32 %v744, %v709
          %v746 = vmul.f32 %v744, %v710
          %v747 = vmul.f32 %v744, %v711
          %v748 = vmul.f32 %v744, %v712
          %v749 = vmul.f32 %v744, %v713
          %v750 = vmul.f32 %v744, %v714
          %v751 = vmul.f32 %v744, %v715
          %v752 = vmul.f32 %v744, %v716
          %v753 = vmul.f32 %v744, %v717
          %v754 = vmul.f32 %v744, %v718
          %v755 = vmul.f32 %v744, %v719
          %v756 = vmul.f32 %v744, %v720
          %v757 = vmul.f32 %v744, %v721
          %v758 = vmul.f32 %v744, %v722
          %v759 = vmul.f32 %v744, %v723
          %v760 = vmul.f32 %v744, %v724
          %v761 = vmul.f32 %v744, %v725
          %v762 = vmul.f32 %v744, %v726
          %v763 = vmul.f32 %v744, %v727
          %v764 = vmul.f32 %v744, %v728
          %v765 = vmul.f32 %v744, %v729
          %v766 = vmul.f32 %v744, %v730
          %v767 = vmul.f32 %v744, %v731
          %v768 = vmul.f32 %v744, %v732
          %v769 = vmul.f32 %v744, %v733
          %v770 = vmul.f32 %v744, %v734
          %v771 = vmul.f32 %v744, %v735
          %v772 = vmul.f32 %v744, %v736
          %v773 = vmul.f32 %v744, %v737
          %v774 = vmul.f32 %v744, %v738
          %v775 = vmul.f32 %v744, %v739
          %v776 = vmul.f32 %v744, %v740
          %v777 = vadd.f32 %v243, %v745
          %v778 = vadd.f32 %v244, %v746
          %v779 = vadd.f32 %v245, %v747
          %v780 = vadd.f32 %v246, %v748
          %v781 = vadd.f32 %v247, %v749
          %v782 = vadd.f32 %v248, %v750
          %v783 = vadd.f32 %v249, %v751
          %v784 = vadd.f32 %v250, %v752
          %v785 = vadd.f32 %v251, %v753
          %v786 = vadd.f32 %v252, %v754
          %v787 = vadd.f32 %v253, %v755
          %v788 = vadd.f32 %v254, %v756
          %v789 = vadd.f32 %v255, %v757
          %v790 = vadd.f32 %v256, %v758
          %v791 = vadd.f32 %v257, %v759
          %v792 = vadd.f32 %v258, %v760
          %v793 = vadd.f32 %v259, %v761
          %v794 = vadd.f32 %v260, %v762
          %v795 = vadd.f32 %v261, %v763
          %v796 = vadd.f32 %v262, %v764
          %v797 = vadd.f32 %v263, %v765
          %v798 = vadd.f32 %v264, %v766
          %v799 = vadd.f32 %v265, %v767
          %v800 = vadd.f32 %v266, %v768
          %v801 = vadd.f32 %v267, %v769
          %v802 = vadd.f32 %v268, %v770
          %v803 = vadd.f32 %v269, %v771
          %v804 = vadd.f32 %v270, %v772
          %v805 = vadd.f32 %v271, %v773
          %v806 = vadd.f32 %v272, %v774
          %v807 = vadd.f32 %v273, %v775
          %v808 = vadd.f32 %v274, %v776
          %809 = vst [vmem:[#allocation2] sm:$0xff] %v777
          %810 = vst [vmem:[#allocation2 + $0x8] sm:$0xff] %v778
          %811 = vst [vmem:[#allocation2 + $0x10] sm:$0xff] %v779
          %812 = vst [vmem:[#allocation2 + $0x18] sm:$0xff] %v780
          %813 = vst [vmem:[#allocation2 + $0x20] sm:$0xff] %v781
          %814 = vst [vmem:[#allocation2 + $0x28] sm:$0xff] %v782
          %815 = vst [vmem:[#allocation2 + $0x30] sm:$0xff] %v783
          %816 = vst [vmem:[#allocation2 + $0x38] sm:$0xff] %v784
          %817 = vst [vmem:[#allocation2 + $0x40] sm:$0xff] %v785
          %818 = vst [vmem:[#allocation2 + $0x48] sm:$0xff] %v786
          %819 = vst [vmem:[#allocation2 + $0x50] sm:$0xff] %v787
          %820 = vst [vmem:[#allocation2 + $0x58] sm:$0xff] %v788
          %821 = vst [vmem:[#allocation2 + $0x60] sm:$0xff] %v789
          %822 = vst [vmem:[#allocation2 + $0x68] sm:$0xff] %v790
          %823 = vst [vmem:[#allocation2 + $0x70] sm:$0xff] %v791
          %824 = vst [vmem:[#allocation2 + $0x78] sm:$0xff] %v792
          %825 = vst [vmem:[#allocation2 + $0x80] sm:$0xff] %v793
          %826 = vst [vmem:[#allocation2 + $0x88] sm:$0xff] %v794
          %827 = vst [vmem:[#allocation2 + $0x90] sm:$0xff] %v795
          %828 = vst [vmem:[#allocation2 + $0x98] sm:$0xff] %v796
          %829 = vst [vmem:[#allocation2 + $0xa0] sm:$0xff] %v797
          %830 = vst [vmem:[#allocation2 + $0xa8] sm:$0xff] %v798
          %831 = vst [vmem:[#allocation2 + $0xb0] sm:$0xff] %v799
          %832 = vst [vmem:[#allocation2 + $0xb8] sm:$0xff] %v800
          %833 = vst [vmem:[#allocation2 + $0xc0] sm:$0xff] %v801
          %834 = vst [vmem:[#allocation2 + $0xc8] sm:$0xff] %v802
          %835 = vst [vmem:[#allocation2 + $0xd0] sm:$0xff] %v803
          %836 = vst [vmem:[#allocation2 + $0xd8] sm:$0xff] %v804
          %837 = vst [vmem:[#allocation2 + $0xe0] sm:$0xff] %v805
          %838 = vst [vmem:[#allocation2 + $0xe8] sm:$0xff] %v806
          %839 = vst [vmem:[#allocation2 + $0xf0] sm:$0xff] %v807
          %840 = vst [vmem:[#allocation2 + $0xf8] sm:$0xff] %v808
          %841 = vadd.xlane.f32.xlu0 %v777
          %v842 = vpop.xlane.xlu0 %841
          %843 = vadd.xlane.f32.xlu0 %v778
          %v844 = vpop.xlane.xlu0 %843
          %845 = vadd.xlane.f32.xlu0 %v779
          %v846 = vpop.xlane.xlu0 %845
          %847 = vadd.xlane.f32.xlu0 %v780
          %v848 = vpop.xlane.xlu0 %847
          %849 = vadd.xlane.f32.xlu0 %v781
          %v850 = vpop.xlane.xlu0 %849
          %851 = vadd.xlane.f32.xlu0 %v782
          %v852 = vpop.xlane.xlu0 %851
          %853 = vadd.xlane.f32.xlu0 %v783
          %v854 = vpop.xlane.xlu0 %853
          %855 = vadd.xlane.f32.xlu0 %v784
          %v856 = vpop.xlane.xlu0 %855
          %857 = vadd.xlane.f32.xlu0 %v785
          %v858 = vpop.xlane.xlu0 %857
          %859 = vadd.xlane.f32.xlu0 %v786
          %v860 = vpop.xlane.xlu0 %859
          %861 = vadd.xlane.f32.xlu0 %v787
          %v862 = vpop.xlane.xlu0 %861
          %863 = vadd.xlane.f32.xlu0 %v788
          %v864 = vpop.xlane.xlu0 %863
          %865 = vadd.xlane.f32.xlu0 %v789
          %v866 = vpop.xlane.xlu0 %865
          %867 = vadd.xlane.f32.xlu0 %v790
          %v868 = vpop.xlane.xlu0 %867
          %869 = vadd.xlane.f32.xlu0 %v791
          %v870 = vpop.xlane.xlu0 %869
          %871 = vadd.xlane.f32.xlu0 %v792
          %v872 = vpop.xlane.xlu0 %871
          %873 = vadd.xlane.f32.xlu0 %v793
          %v874 = vpop.xlane.xlu0 %873
          %875 = vadd.xlane.f32.xlu0 %v794
          %v876 = vpop.xlane.xlu0 %875
          %877 = vadd.xlane.f32.xlu0 %v795
          %v878 = vpop.xlane.xlu0 %877
          %879 = vadd.xlane.f32.xlu0 %v796
          %v880 = vpop.xlane.xlu0 %879
          %881 = vadd.xlane.f32.xlu0 %v797
          %v882 = vpop.xlane.xlu0 %881
          %883 = vadd.xlane.f32.xlu0 %v798
          %v884 = vpop.xlane.xlu0 %883
          %885 = vadd.xlane.f32.xlu0 %v799
          %v886 = vpop.xlane.xlu0 %885
          %887 = vadd.xlane.f32.xlu0 %v800
          %v888 = vpop.xlane.xlu0 %887
          %889 = vadd.xlane.f32.xlu0 %v801
          %v890 = vpop.xlane.xlu0 %889
          %891 = vadd.xlane.f32.xlu0 %v802
          %v892 = vpop.xlane.xlu0 %891
          %893 = vadd.xlane.f32.xlu0 %v803
          %v894 = vpop.xlane.xlu0 %893
          %895 = vadd.xlane.f32.xlu0 %v804
          %v896 = vpop.xlane.xlu0 %895
          %897 = vadd.xlane.f32.xlu0 %v805
          %v898 = vpop.xlane.xlu0 %897
          %899 = vadd.xlane.f32.xlu0 %v806
          %v900 = vpop.xlane.xlu0 %899
          %901 = vadd.xlane.f32.xlu0 %v807
          %v902 = vpop.xlane.xlu0 %901
          %903 = vadd.xlane.f32.xlu0 %v808
          %v904 = vpop.xlane.xlu0 %903
          %v905 = vmul.f32 %v842, 0.020833334
          %v906 = vmul.f32 %v844, 0.020833334
          %v907 = vmul.f32 %v846, 0.020833334
          %v908 = vmul.f32 %v848, 0.020833334
          %v909 = vmul.f32 %v850, 0.020833334
          %v910 = vmul.f32 %v852, 0.020833334
          %v911 = vmul.f32 %v854, 0.020833334
          %v912 = vmul.f32 %v856, 0.020833334
          %v913 = vmul.f32 %v858, 0.020833334
          %v914 = vmul.f32 %v860, 0.020833334
          %v915 = vmul.f32 %v862, 0.020833334
          %v916 = vmul.f32 %v864, 0.020833334
          %v917 = vmul.f32 %v866, 0.020833334
          %v918 = vmul.f32 %v868, 0.020833334
          %v919 = vmul.f32 %v870, 0.020833334
          %v920 = vmul.f32 %v872, 0.020833334
          %v921 = vmul.f32 %v874, 0.020833334
          %v922 = vmul.f32 %v876, 0.020833334
          %v923 = vmul.f32 %v878, 0.020833334
          %v924 = vmul.f32 %v880, 0.020833334
          %v925 = vmul.f32 %v882, 0.020833334
          %v926 = vmul.f32 %v884, 0.020833334
          %v927 = vmul.f32 %v886, 0.020833334
          %v928 = vmul.f32 %v888, 0.020833334
          %v929 = vmul.f32 %v890, 0.020833334
          %v930 = vmul.f32 %v892, 0.020833334
          %v931 = vmul.f32 %v894, 0.020833334
          %v932 = vmul.f32 %v896, 0.020833334
          %v933 = vmul.f32 %v898, 0.020833334
          %v934 = vmul.f32 %v900, 0.020833334
          %v935 = vmul.f32 %v902, 0.020833334
          %v936 = vmul.f32 %v904, 0.020833334
          %v937 = vsub.f32 %v777, %v905
          %v938 = vsub.f32 %v778, %v906
          %v939 = vsub.f32 %v779, %v907
          %v940 = vsub.f32 %v780, %v908
          %v941 = vsub.f32 %v781, %v909
          %v942 = vsub.f32 %v782, %v910
          %v943 = vsub.f32 %v783, %v911
          %v944 = vsub.f32 %v784, %v912
          %v945 = vsub.f32 %v785, %v913
          %v946 = vsub.f32 %v786, %v914
          %v947 = vsub.f32 %v787, %v915
          %v948 = vsub.f32 %v788, %v916
          %v949 = vsub.f32 %v789, %v917
          %v950 = vsub.f32 %v790, %v918
          %v951 = vsub.f32 %v791, %v919
          %v952 = vsub.f32 %v792, %v920
          %v953 = vsub.f32 %v793, %v921
          %v954 = vsub.f32 %v794, %v922
          %v955 = vsub.f32 %v795, %v923
          %v956 = vsub.f32 %v796, %v924
          %v957 = vsub.f32 %v797, %v925
          %v958 = vsub.f32 %v798, %v926
          %v959 = vsub.f32 %v799, %v927
          %v960 = vsub.f32 %v800, %v928
          %v961 = vsub.f32 %v801, %v929
          %v962 = vsub.f32 %v802, %v930
          %v963 = vsub.f32 %v803, %v931
          %v964 = vsub.f32 %v804, %v932
          %v965 = vsub.f32 %v805, %v933
          %v966 = vsub.f32 %v806, %v934
          %v967 = vsub.f32 %v807, %v935
          %v968 = vsub.f32 %v808, %v936
          %v969 = vmul.f32 %v937, %v279
          %v970 = vmul.f32 %v938, %v279
          %v971 = vmul.f32 %v939, %v279
          %v972 = vmul.f32 %v940, %v279
          %v973 = vmul.f32 %v941, %v279
          %v974 = vmul.f32 %v942, %v279
          %v975 = vmul.f32 %v943, %v279
          %v976 = vmul.f32 %v944, %v279
          %v977 = vmul.f32 %v945, %v279
          %v978 = vmul.f32 %v946, %v279
          %v979 = vmul.f32 %v947, %v279
          %v980 = vmul.f32 %v948, %v279
          %v981 = vmul.f32 %v949, %v279
          %v982 = vmul.f32 %v950, %v279
          %v983 = vmul.f32 %v951, %v279
          %v984 = vmul.f32 %v952, %v279
          %v985 = vmul.f32 %v953, %v279
          %v986 = vmul.f32 %v954, %v279
          %v987 = vmul.f32 %v955, %v279
          %v988 = vmul.f32 %v956, %v279
          %v989 = vmul.f32 %v957, %v279
          %v990 = vmul.f32 %v958, %v279
          %v991 = vmul.f32 %v959, %v279
          %v992 = vmul.f32 %v960, %v279
          %v993 = vmul.f32 %v961, %v279
          %v994 = vmul.f32 %v962, %v279
          %v995 = vmul.f32 %v963, %v279
          %v996 = vmul.f32 %v964, %v279
          %v997 = vmul.f32 %v965, %v279
          %v998 = vmul.f32 %v966, %v279
          %v999 = vmul.f32 %v967, %v279
          %v1000 = vmul.f32 %v968, %v279
          %v1001 = vmul.f32 %v937, %v969
          %v1002 = vmul.f32 %v938, %v970
          %v1003 = vmul.f32 %v939, %v971
          %v1004 = vmul.f32 %v940, %v972
          %v1005 = vmul.f32 %v941, %v973
          %v1006 = vmul.f32 %v942, %v974
          %v1007 = vmul.f32 %v943, %v975
          %v1008 = vmul.f32 %v944, %v976
          %v1009 = vmul.f32 %v945, %v977
          %v1010 = vmul.f32 %v946, %v978
          %v1011 = vmul.f32 %v947, %v979
          %v1012 = vmul.f32 %v948, %v980
          %v1013 = vmul.f32 %v949, %v981
          %v1014 = vmul.f32 %v950, %v982
          %v1015 = vmul.f32 %v951, %v983
          %v1016 = vmul.f32 %v952, %v984
          %v1017 = vmul.f32 %v953, %v985
          %v1018 = vmul.f32 %v954, %v986
          %v1019 = vmul.f32 %v955, %v987
          %v1020 = vmul.f32 %v956, %v988
          %v1021 = vmul.f32 %v957, %v989
          %v1022 = vmul.f32 %v958, %v990
          %v1023 = vmul.f32 %v959, %v991
          %v1024 = vmul.f32 %v960, %v992
          %v1025 = vmul.f32 %v961, %v993
          %v1026 = vmul.f32 %v962, %v994
          %v1027 = vmul.f32 %v963, %v995
          %v1028 = vmul.f32 %v964, %v996
          %v1029 = vmul.f32 %v965, %v997
          %v1030 = vmul.f32 %v966, %v998
          %v1031 = vmul.f32 %v967, %v999
          %v1032 = vmul.f32 %v968, %v1000
          %1033 = vadd.xlane.f32.xlu0 %v1001
          %v1034 = vpop.xlane.xlu0 %1033
          %1035 = vadd.xlane.f32.xlu0 %v1002
          %v1036 = vpop.xlane.xlu0 %1035
          %1037 = vadd.xlane.f32.xlu0 %v1003
          %v1038 = vpop.xlane.xlu0 %1037
          %1039 = vadd.xlane.f32.xlu0 %v1004
          %v1040 = vpop.xlane.xlu0 %1039
          %1041 = vadd.xlane.f32.xlu0 %v1005
          %v1042 = vpop.xlane.xlu0 %1041
          %1043 = vadd.xlane.f32.xlu0 %v1006
          %v1044 = vpop.xlane.xlu0 %1043
          %1045 = vadd.xlane.f32.xlu0 %v1007
          %v1046 = vpop.xlane.xlu0 %1045
          %1047 = vadd.xlane.f32.xlu0 %v1008
          %v1048 = vpop.xlane.xlu0 %1047
          %1049 = vadd.xlane.f32.xlu0 %v1009
          %v1050 = vpop.xlane.xlu0 %1049
          %1051 = vadd.xlane.f32.xlu0 %v1010
          %v1052 = vpop.xlane.xlu0 %1051
          %1053 = vadd.xlane.f32.xlu0 %v1011
          %v1054 = vpop.xlane.xlu0 %1053
          %1055 = vadd.xlane.f32.xlu0 %v1012
          %v1056 = vpop.xlane.xlu0 %1055
          %1057 = vadd.xlane.f32.xlu0 %v1013
          %v1058 = vpop.xlane.xlu0 %1057
          %1059 = vadd.xlane.f32.xlu0 %v1014
          %v1060 = vpop.xlane.xlu0 %1059
          %1061 = vadd.xlane.f32.xlu0 %v1015
          %v1062 = vpop.xlane.xlu0 %1061
          %1063 = vadd.xlane.f32.xlu0 %v1016
          %v1064 = vpop.xlane.xlu0 %1063
          %1065 = vadd.xlane.f32.xlu0 %v1017
          %v1066 = vpop.xlane.xlu0 %1065
          %1067 = vadd.xlane.f32.xlu0 %v1018
          %v1068 = vpop.xlane.xlu0 %1067
          %1069 = vadd.xlane.f32.xlu0 %v1019
          %v1070 = vpop.xlane.xlu0 %1069
          %1071 = vadd.xlane.f32.xlu0 %v1020
          %v1072 = vpop.xlane.xlu0 %1071
          %1073 = vadd.xlane.f32.xlu0 %v1021
          %v1074 = vpop.xlane.xlu0 %1073
          %1075 = vadd.xlane.f32.xlu0 %v1022
          %v1076 = vpop.xlane.xlu0 %1075
          %1077 = vadd.xlane.f32.xlu0 %v1023
          %v1078 = vpop.xlane.xlu0 %1077
          %1079 = vadd.xlane.f32.xlu0 %v1024
          %v1080 = vpop.xlane.xlu0 %1079
          %1081 = vadd.xlane.f32.xlu0 %v1025
          %v1082 = vpop.xlane.xlu0 %1081
          %1083 = vadd.xlane.f32.xlu0 %v1026
          %v1084 = vpop.xlane.xlu0 %1083
          %1085 = vadd.xlane.f32.xlu0 %v1027
          %v1086 = vpop.xlane.xlu0 %1085
          %1087 = vadd.xlane.f32.xlu0 %v1028
          %v1088 = vpop.xlane.xlu0 %1087
          %1089 = vadd.xlane.f32.xlu0 %v1029
          %v1090 = vpop.xlane.xlu0 %1089
          %1091 = vadd.xlane.f32.xlu0 %v1030
          %v1092 = vpop.xlane.xlu0 %1091
          %1093 = vadd.xlane.f32.xlu0 %v1031
          %v1094 = vpop.xlane.xlu0 %1093
          %1095 = vadd.xlane.f32.xlu0 %v1032
          %v1096 = vpop.xlane.xlu0 %1095
          %v1097 = vmul.f32 %v1034, 0.020833334
          %v1098 = vmul.f32 %v1036, 0.020833334
          %v1099 = vmul.f32 %v1038, 0.020833334
          %v1100 = vmul.f32 %v1040, 0.020833334
          %v1101 = vmul.f32 %v1042, 0.020833334
          %v1102 = vmul.f32 %v1044, 0.020833334
          %v1103 = vmul.f32 %v1046, 0.020833334
          %v1104 = vmul.f32 %v1048, 0.020833334
          %v1105 = vmul.f32 %v1050, 0.020833334
          %v1106 = vmul.f32 %v1052, 0.020833334
          %v1107 = vmul.f32 %v1054, 0.020833334
          %v1108 = vmul.f32 %v1056, 0.020833334
          %v1109 = vmul.f32 %v1058, 0.020833334
          %v1110 = vmul.f32 %v1060, 0.020833334
          %v1111 = vmul.f32 %v1062, 0.020833334
          %v1112 = vmul.f32 %v1064, 0.020833334
          %v1113 = vmul.f32 %v1066, 0.020833334
          %v1114 = vmul.f32 %v1068, 0.020833334
          %v1115 = vmul.f32 %v1070, 0.020833334
          %v1116 = vmul.f32 %v1072, 0.020833334
          %v1117 = vmul.f32 %v1074, 0.020833334
          %v1118 = vmul.f32 %v1076, 0.020833334
          %v1119 = vmul.f32 %v1078, 0.020833334
          %v1120 = vmul.f32 %v1080, 0.020833334
          %v1121 = vmul.f32 %v1082, 0.020833334
          %v1122 = vmul.f32 %v1084, 0.020833334
          %v1123 = vmul.f32 %v1086, 0.020833334
          %v1124 = vmul.f32 %v1088, 0.020833334
          %v1125 = vmul.f32 %v1090, 0.020833334
          %v1126 = vmul.f32 %v1092, 0.020833334
          %v1127 = vmul.f32 %v1094, 0.020833334
          %v1128 = vmul.f32 %v1096, 0.020833334
          %v1129 = vadd.f32 %v1097, 1e-05
          %v1130 = vadd.f32 %v1098, 1e-05
          %v1131 = vadd.f32 %v1099, 1e-05
          %v1132 = vadd.f32 %v1100, 1e-05
          %v1133 = vadd.f32 %v1101, 1e-05
          %v1134 = vadd.f32 %v1102, 1e-05
          %v1135 = vadd.f32 %v1103, 1e-05
          %v1136 = vadd.f32 %v1104, 1e-05
          %v1137 = vadd.f32 %v1105, 1e-05
          %v1138 = vadd.f32 %v1106, 1e-05
          %v1139 = vadd.f32 %v1107, 1e-05
          %v1140 = vadd.f32 %v1108, 1e-05
          %v1141 = vadd.f32 %v1109, 1e-05
          %v1142 = vadd.f32 %v1110, 1e-05
          %v1143 = vadd.f32 %v1111, 1e-05
          %v1144 = vadd.f32 %v1112, 1e-05
          %v1145 = vadd.f32 %v1113, 1e-05
          %v1146 = vadd.f32 %v1114, 1e-05
          %v1147 = vadd.f32 %v1115, 1e-05
          %v1148 = vadd.f32 %v1116, 1e-05
          %v1149 = vadd.f32 %v1117, 1e-05
          %v1150 = vadd.f32 %v1118, 1e-05
          %v1151 = vadd.f32 %v1119, 1e-05
          %v1152 = vadd.f32 %v1120, 1e-05
          %v1153 = vadd.f32 %v1121, 1e-05
          %v1154 = vadd.f32 %v1122, 1e-05
          %v1155 = vadd.f32 %v1123, 1e-05
          %v1156 = vadd.f32 %v1124, 1e-05
          %v1157 = vadd.f32 %v1125, 1e-05
          %v1158 = vadd.f32 %v1126, 1e-05
          %v1159 = vadd.f32 %v1127, 1e-05
          %v1160 = vadd.f32 %v1128, 1e-05
          %v1161 = vrsqrt.pop %v1129
          %v1162 = vrsqrt.pop %v1130
          %v1163 = vrsqrt.pop %v1131
          %v1164 = vrsqrt.pop %v1132
          %v1165 = vrsqrt.pop %v1133
          %v1166 = vrsqrt.pop %v1134
          %v1167 = vrsqrt.pop %v1135
          %v1168 = vrsqrt.pop %v1136
          %v1169 = vrsqrt.pop %v1137
          %v1170 = vrsqrt.pop %v1138
          %v1171 = vrsqrt.pop %v1139
          %v1172 = vrsqrt.pop %v1140
          %v1173 = vrsqrt.pop %v1141
          %v1174 = vrsqrt.pop %v1142
          %v1175 = vrsqrt.pop %v1143
          %v1176 = vrsqrt.pop %v1144
          %v1177 = vrsqrt.pop %v1145
          %v1178 = vrsqrt.pop %v1146
          %v1179 = vrsqrt.pop %v1147
          %v1180 = vrsqrt.pop %v1148
          %v1181 = vrsqrt.pop %v1149
          %v1182 = vrsqrt.pop %v1150
          %v1183 = vrsqrt.pop %v1151
          %v1184 = vrsqrt.pop %v1152
          %v1185 = vrsqrt.pop %v1153
          %v1186 = vrsqrt.pop %v1154
          %v1187 = vrsqrt.pop %v1155
          %v1188 = vrsqrt.pop %v1156
          %v1189 = vrsqrt.pop %v1157
          %v1190 = vrsqrt.pop %v1158
          %v1191 = vrsqrt.pop %v1159
          %v1192 = vrsqrt.pop %v1160
          %v1193 = vmul.f32 %v937, %v1161
          %v1194 = vmul.f32 %v938, %v1162
          %v1195 = vmul.f32 %v939, %v1163
          %v1196 = vmul.f32 %v940, %v1164
          %v1197 = vmul.f32 %v941, %v1165
          %v1198 = vmul.f32 %v942, %v1166
          %v1199 = vmul.f32 %v943, %v1167
          %v1200 = vmul.f32 %v944, %v1168
          %v1201 = vmul.f32 %v945, %v1169
          %v1202 = vmul.f32 %v946, %v1170
          %v1203 = vmul.f32 %v947, %v1171
          %v1204 = vmul.f32 %v948, %v1172
          %v1205 = vmul.f32 %v949, %v1173
          %v1206 = vmul.f32 %v950, %v1174
          %v1207 = vmul.f32 %v951, %v1175
          %v1208 = vmul.f32 %v952, %v1176
          %v1209 = vmul.f32 %v953, %v1177
          %v1210 = vmul.f32 %v954, %v1178
          %v1211 = vmul.f32 %v955, %v1179
          %v1212 = vmul.f32 %v956, %v1180
          %v1213 = vmul.f32 %v957, %v1181
          %v1214 = vmul.f32 %v958, %v1182
          %v1215 = vmul.f32 %v959, %v1183
          %v1216 = vmul.f32 %v960, %v1184
          %v1217 = vmul.f32 %v961, %v1185
          %v1218 = vmul.f32 %v962, %v1186
          %v1219 = vmul.f32 %v963, %v1187
          %v1220 = vmul.f32 %v964, %v1188
          %v1221 = vmul.f32 %v965, %v1189
          %v1222 = vmul.f32 %v966, %v1190
          %v1223 = vmul.f32 %v967, %v1191
          %v1224 = vmul.f32 %v968, %v1192
          %v1225 = vlaneseq
          %v1226 = vshrl.u32 %v1225, 7
          %v1227 = vsub.s32 0, %v1226
          %v1228 = vrot.slane %v283, %v1227
          %v1229 = vmul.f32 %v1193, %v1228
          %v1230 = vmul.f32 %v1194, %v1228
          %v1231 = vmul.f32 %v1195, %v1228
          %v1232 = vmul.f32 %v1196, %v1228
          %v1233 = vmul.f32 %v1197, %v1228
          %v1234 = vmul.f32 %v1198, %v1228
          %v1235 = vmul.f32 %v1199, %v1228
          %v1236 = vmul.f32 %v1200, %v1228
          %v1237 = vmul.f32 %v1201, %v1228
          %v1238 = vmul.f32 %v1202, %v1228
          %v1239 = vmul.f32 %v1203, %v1228
          %v1240 = vmul.f32 %v1204, %v1228
          %v1241 = vmul.f32 %v1205, %v1228
          %v1242 = vmul.f32 %v1206, %v1228
          %v1243 = vmul.f32 %v1207, %v1228
          %v1244 = vmul.f32 %v1208, %v1228
          %v1245 = vmul.f32 %v1209, %v1228
          %v1246 = vmul.f32 %v1210, %v1228
          %v1247 = vmul.f32 %v1211, %v1228
          %v1248 = vmul.f32 %v1212, %v1228
          %v1249 = vmul.f32 %v1213, %v1228
          %v1250 = vmul.f32 %v1214, %v1228
          %v1251 = vmul.f32 %v1215, %v1228
          %v1252 = vmul.f32 %v1216, %v1228
          %v1253 = vmul.f32 %v1217, %v1228
          %v1254 = vmul.f32 %v1218, %v1228
          %v1255 = vmul.f32 %v1219, %v1228
          %v1256 = vmul.f32 %v1220, %v1228
          %v1257 = vmul.f32 %v1221, %v1228
          %v1258 = vmul.f32 %v1222, %v1228
          %v1259 = vmul.f32 %v1223, %v1228
          %v1260 = vmul.f32 %v1224, %v1228
          %v1261 = vlaneseq
          %v1262 = vshrl.u32 %v1261, 7
          %v1263 = vsub.s32 0, %v1262
          %v1264 = vrot.slane %v284, %v1263
          %v1265 = vadd.f32 %v1229, %v1264
          %v1266 = vadd.f32 %v1230, %v1264
          %v1267 = vadd.f32 %v1231, %v1264
          %v1268 = vadd.f32 %v1232, %v1264
          %v1269 = vadd.f32 %v1233, %v1264
          %v1270 = vadd.f32 %v1234, %v1264
          %v1271 = vadd.f32 %v1235, %v1264
          %v1272 = vadd.f32 %v1236, %v1264
          %v1273 = vadd.f32 %v1237, %v1264
          %v1274 = vadd.f32 %v1238, %v1264
          %v1275 = vadd.f32 %v1239, %v1264
          %v1276 = vadd.f32 %v1240, %v1264
          %v1277 = vadd.f32 %v1241, %v1264
          %v1278 = vadd.f32 %v1242, %v1264
          %v1279 = vadd.f32 %v1243, %v1264
          %v1280 = vadd.f32 %v1244, %v1264
          %v1281 = vadd.f32 %v1245, %v1264
          %v1282 = vadd.f32 %v1246, %v1264
          %v1283 = vadd.f32 %v1247, %v1264
          %v1284 = vadd.f32 %v1248, %v1264
          %v1285 = vadd.f32 %v1249, %v1264
          %v1286 = vadd.f32 %v1250, %v1264
          %v1287 = vadd.f32 %v1251, %v1264
          %v1288 = vadd.f32 %v1252, %v1264
          %v1289 = vadd.f32 %v1253, %v1264
          %v1290 = vadd.f32 %v1254, %v1264
          %v1291 = vadd.f32 %v1255, %v1264
          %v1292 = vadd.f32 %v1256, %v1264
          %v1293 = vadd.f32 %v1257, %v1264
          %v1294 = vadd.f32 %v1258, %v1264
          %v1295 = vadd.f32 %v1259, %v1264
          %v1296 = vadd.f32 %v1260, %v1264
          %v1297 = vpack.c.bf16 %v1266, %v1265
          %v1298 = vpack.c.bf16 %v1268, %v1267
          %v1299 = vpack.c.bf16 %v1270, %v1269
          %v1300 = vpack.c.bf16 %v1272, %v1271
          %v1301 = vpack.c.bf16 %v1274, %v1273
          %v1302 = vpack.c.bf16 %v1276, %v1275
          %v1303 = vpack.c.bf16 %v1278, %v1277
          %v1304 = vpack.c.bf16 %v1280, %v1279
          %v1305 = vpack.c.bf16 %v1282, %v1281
          %v1306 = vpack.c.bf16 %v1284, %v1283
          %v1307 = vpack.c.bf16 %v1286, %v1285
          %v1308 = vpack.c.bf16 %v1288, %v1287
          %v1309 = vpack.c.bf16 %v1290, %v1289
          %v1310 = vpack.c.bf16 %v1292, %v1291
          %v1311 = vpack.c.bf16 %v1294, %v1293
          %v1312 = vpack.c.bf16 %v1296, %v1295
          %v1329 = vunpack.c.l.b16 %v1297
          %v1330 = vunpack.c.h.b16 %v1297
          %v1331 = vunpack.c.l.b16 %v1298
          %v1332 = vunpack.c.h.b16 %v1298
          %v1333 = vunpack.c.l.b16 %v1299
          %v1334 = vunpack.c.h.b16 %v1299
          %v1335 = vunpack.c.l.b16 %v1300
          %v1336 = vunpack.c.h.b16 %v1300
          %v1337 = vunpack.c.l.b16 %v1301
          %v1338 = vunpack.c.h.b16 %v1301
          %v1339 = vunpack.c.l.b16 %v1302
          %v1340 = vunpack.c.h.b16 %v1302
          %v1341 = vunpack.c.l.b16 %v1303
          %v1342 = vunpack.c.h.b16 %v1303
          %v1343 = vunpack.c.l.b16 %v1304
          %v1344 = vunpack.c.h.b16 %v1304
          %v1345 = vunpack.c.l.b16 %v1305
          %v1346 = vunpack.c.h.b16 %v1305
          %v1347 = vunpack.c.l.b16 %v1306
          %v1348 = vunpack.c.h.b16 %v1306
          %v1349 = vunpack.c.l.b16 %v1307
          %v1350 = vunpack.c.h.b16 %v1307
          %v1351 = vunpack.c.l.b16 %v1308
          %v1352 = vunpack.c.h.b16 %v1308
          %v1353 = vunpack.c.l.b16 %v1309
          %v1354 = vunpack.c.h.b16 %v1309
          %v1355 = vunpack.c.l.b16 %v1310
          %v1356 = vunpack.c.h.b16 %v1310
          %v1357 = vunpack.c.l.b16 %v1311
          %v1358 = vunpack.c.h.b16 %v1311
          %v1359 = vunpack.c.l.b16 %v1312
          %v1360 = vunpack.c.h.b16 %v1312
          %v1361 = vpack.c.b16 %v1329, %v1329
          %v1362 = vpack.c.b16 %v1330, %v1330
          %v1363 = vpack.c.b16 %v1331, %v1331
          %v1364 = vpack.c.b16 %v1332, %v1332
          %v1365 = vpack.c.b16 %v1333, %v1333
          %v1366 = vpack.c.b16 %v1334, %v1334
          %v1367 = vpack.c.b16 %v1335, %v1335
          %v1368 = vpack.c.b16 %v1336, %v1336
          %v1369 = vpack.c.b16 %v1337, %v1337
          %v1370 = vpack.c.b16 %v1338, %v1338
          %v1371 = vpack.c.b16 %v1339, %v1339
          %v1372 = vpack.c.b16 %v1340, %v1340
          %v1373 = vpack.c.b16 %v1341, %v1341
          %v1374 = vpack.c.b16 %v1342, %v1342
          %v1375 = vpack.c.b16 %v1343, %v1343
          %v1376 = vpack.c.b16 %v1344, %v1344
          %v1377 = vpack.c.b16 %v1345, %v1345
          %v1378 = vpack.c.b16 %v1346, %v1346
          %v1379 = vpack.c.b16 %v1347, %v1347
          %v1380 = vpack.c.b16 %v1348, %v1348
          %v1381 = vpack.c.b16 %v1349, %v1349
          %v1382 = vpack.c.b16 %v1350, %v1350
          %v1383 = vpack.c.b16 %v1351, %v1351
          %v1384 = vpack.c.b16 %v1352, %v1352
          %v1385 = vpack.c.b16 %v1353, %v1353
          %v1386 = vpack.c.b16 %v1354, %v1354
          %v1387 = vpack.c.b16 %v1355, %v1355
          %v1388 = vpack.c.b16 %v1356, %v1356
          %v1389 = vpack.c.b16 %v1357, %v1357
          %v1390 = vpack.c.b16 %v1358, %v1358
          %v1391 = vpack.c.b16 %v1359, %v1359
          %v1392 = vpack.c.b16 %v1360, %v1360
          %1425 = vst [vmem:[#allocation3] sm:$0xf] %v1361
          %1426 = vst [vmem:[#allocation3 + $0x4] sm:$0xf] %v1362
          %1427 = vst [vmem:[#allocation3 + $0x8] sm:$0xf] %v1363
          %1428 = vst [vmem:[#allocation3 + $0xc] sm:$0xf] %v1364
          %1429 = vst [vmem:[#allocation3 + $0x10] sm:$0xf] %v1365
          %1430 = vst [vmem:[#allocation3 + $0x14] sm:$0xf] %v1366
          %1431 = vst [vmem:[#allocation3 + $0x18] sm:$0xf] %v1367
          %1432 = vst [vmem:[#allocation3 + $0x1c] sm:$0xf] %v1368
          %1433 = vst [vmem:[#allocation3 + $0x20] sm:$0xf] %v1369
          %1434 = vst [vmem:[#allocation3 + $0x24] sm:$0xf] %v1370
          %1435 = vst [vmem:[#allocation3 + $0x28] sm:$0xf] %v1371
          %1436 = vst [vmem:[#allocation3 + $0x2c] sm:$0xf] %v1372
          %1437 = vst [vmem:[#allocation3 + $0x30] sm:$0xf] %v1373
          %1438 = vst [vmem:[#allocation3 + $0x34] sm:$0xf] %v1374
          %1439 = vst [vmem:[#allocation3 + $0x38] sm:$0xf] %v1375
          %1440 = vst [vmem:[#allocation3 + $0x3c] sm:$0xf] %v1376
          %1441 = vst [vmem:[#allocation3 + $0x40] sm:$0xf] %v1377
          %1442 = vst [vmem:[#allocation3 + $0x44] sm:$0xf] %v1378
          %1443 = vst [vmem:[#allocation3 + $0x48] sm:$0xf] %v1379
          %1444 = vst [vmem:[#allocation3 + $0x4c] sm:$0xf] %v1380
          %1445 = vst [vmem:[#allocation3 + $0x50] sm:$0xf] %v1381
          %1446 = vst [vmem:[#allocation3 + $0x54] sm:$0xf] %v1382
          %1447 = vst [vmem:[#allocation3 + $0x58] sm:$0xf] %v1383
          %1448 = vst [vmem:[#allocation3 + $0x5c] sm:$0xf] %v1384
          %1449 = vst [vmem:[#allocation3 + $0x60] sm:$0xf] %v1385
          %1450 = vst [vmem:[#allocation3 + $0x64] sm:$0xf] %v1386
          %1451 = vst [vmem:[#allocation3 + $0x68] sm:$0xf] %v1387
          %1452 = vst [vmem:[#allocation3 + $0x6c] sm:$0xf] %v1388
          %1453 = vst [vmem:[#allocation3 + $0x70] sm:$0xf] %v1389
          %1454 = vst [vmem:[#allocation3 + $0x74] sm:$0xf] %v1390
          %1455 = vst [vmem:[#allocation3 + $0x78] sm:$0xf] %v1391
          %1456 = vst [vmem:[#allocation3 + $0x7c] sm:$0xf] %v1392
          %1457 = vst [vmem:[%s230] sm:$0xff] 0.0
          %1458 = vst [vmem:[%s230 + $0x8] sm:$0xff] 0.0
          %1459 = vst [vmem:[%s230 + $0x10] sm:$0xff] 0.0
          %1460 = vst [vmem:[%s230 + $0x18] sm:$0xff] 0.0
          %1461 = vst [vmem:[%s230 + $0x20] sm:$0xff] 0.0
          %1462 = vst [vmem:[%s230 + $0x28] sm:$0xff] 0.0
          %1463 = vst [vmem:[%s230 + $0x30] sm:$0xff] 0.0
          %1464 = vst [vmem:[%s230 + $0x38] sm:$0xff] 0.0
          %1465 = vst [vmem:[%s230 + $0x40] sm:$0xff] 0.0
          %1466 = vst [vmem:[%s230 + $0x48] sm:$0xff] 0.0
          %1467 = vst [vmem:[%s230 + $0x50] sm:$0xff] 0.0
          %1468 = vst [vmem:[%s230 + $0x58] sm:$0xff] 0.0
          %1469 = vst [vmem:[%s230 + $0x60] sm:$0xff] 0.0
          %1470 = vst [vmem:[%s230 + $0x68] sm:$0xff] 0.0
          %1471 = vst [vmem:[%s230 + $0x70] sm:$0xff] 0.0
          %1472 = vst [vmem:[%s230 + $0x78] sm:$0xff] 0.0
          %1473 = vst [vmem:[%s230 + $0x80] sm:$0xff] 0.0
          %1474 = vst [vmem:[%s230 + $0x88] sm:$0xff] 0.0
          %1475 = vst [vmem:[%s230 + $0x90] sm:$0xff] 0.0
          %1476 = vst [vmem:[%s230 + $0x98] sm:$0xff] 0.0
          %1477 = vst [vmem:[%s230 + $0xa0] sm:$0xff] 0.0
          %1478 = vst [vmem:[%s230 + $0xa8] sm:$0xff] 0.0
          %1479 = vst [vmem:[%s230 + $0xb0] sm:$0xff] 0.0
          %1480 = vst [vmem:[%s230 + $0xb8] sm:$0xff] 0.0
          %1481 = vst [vmem:[%s230 + $0xc0] sm:$0xff] 0.0
          %1482 = vst [vmem:[%s230 + $0xc8] sm:$0xff] 0.0
          %1483 = vst [vmem:[%s230 + $0xd0] sm:$0xff] 0.0
          %1484 = vst [vmem:[%s230 + $0xd8] sm:$0xff] 0.0
          %1485 = vst [vmem:[%s230 + $0xe0] sm:$0xff] 0.0
          %1486 = vst [vmem:[%s230 + $0xe8] sm:$0xff] 0.0
          %1487 = vst [vmem:[%s230 + $0xf0] sm:$0xff] 0.0
          %1488 = vst [vmem:[%s230 + $0xf8] sm:$0xff] 0.0
        $region44: #{metaformer_block.1} parent=39 // pred_fallthru
          _
        %s1489 = smul.u32 %s24, 128
        %s1490 = sshra.s32 %s1489, 7
        %s1491 = sand.u32 %s1489, 127
        %s1492 = scalar_lea.vmem %s2, %s1490
        %v1493 = vld [vmem:[%s1492] sm:$0x1]
        %s1494 = smul.addr %s1490, 4
        %s1495 = scalar_lea.vmem %s3, %s1494
        %v1496 = vld [vmem:[%s1495] sm:$0xf]
        %v1497 = vld [vmem:[%s1495 + $0x8] sm:$0xf]
        %v1498 = vld [vmem:[%s1495 + $0x10] sm:$0xf]
        %v1499 = vld [vmem:[%s1495 + $0x18] sm:$0xf]
        %v1500 = vld [vmem:[%s1495 + $0x20] sm:$0xf]
        %v1501 = vld [vmem:[%s1495 + $0x28] sm:$0xf]
        %v1502 = vld [vmem:[%s1495 + $0x30] sm:$0xf]
        %v1503 = vld [vmem:[%s1495 + $0x38] sm:$0xf]
        %v1504 = vld [vmem:[%s1495 + $0x40] sm:$0xf]
        %v1505 = vld [vmem:[%s1495 + $0x48] sm:$0xf]
        %v1506 = vld [vmem:[%s1495 + $0x50] sm:$0xf]
        %v1507 = vld [vmem:[%s1495 + $0x58] sm:$0xf]
        %v1508 = vld [vmem:[%s1495 + $0x60] sm:$0xf]
        %v1509 = vld [vmem:[%s1495 + $0x68] sm:$0xf]
        %v1510 = vld [vmem:[%s1495 + $0x70] sm:$0xf]
        %v1511 = vld [vmem:[%s1495 + $0x78] sm:$0xf]
        %s1512 = sshra.s32 %s1489, 3
        %s1513 = sand.u32 %s1489, 7
        %s1514 = smul.addr %s1512, 4
        %s1515 = scalar_lea.vmem %s4, %s1514
        %v1516 = vld [vmem:[%s1515] sm:$0xf]
        %v1517 = vld [vmem:[%s1515 + $0x4] sm:$0xf]
        %v1518 = vld [vmem:[%s1515 + $0x8] sm:$0xf]
        %v1519 = vld [vmem:[%s1515 + $0xc] sm:$0xf]
        %v1520 = vld [vmem:[%s1515 + $0x10] sm:$0xf]
        %v1521 = vld [vmem:[%s1515 + $0x14] sm:$0xf]
        %v1522 = vld [vmem:[%s1515 + $0x18] sm:$0xf]
        %v1523 = vld [vmem:[%s1515 + $0x1c] sm:$0xf]
        %v1524 = vld [vmem:[%s1515 + $0x20] sm:$0xf]
        %v1525 = vld [vmem:[%s1515 + $0x24] sm:$0xf]
        %v1526 = vld [vmem:[%s1515 + $0x28] sm:$0xf]
        %v1527 = vld [vmem:[%s1515 + $0x2c] sm:$0xf]
        %v1528 = vld [vmem:[%s1515 + $0x30] sm:$0xf]
        %v1529 = vld [vmem:[%s1515 + $0x34] sm:$0xf]
        %v1530 = vld [vmem:[%s1515 + $0x38] sm:$0xf]
        %v1531 = vld [vmem:[%s1515 + $0x3c] sm:$0xf]
        %v1532 = vld [vmem:[#allocation3] sm:$0xf]
        %v1533 = vld [vmem:[#allocation3 + $0x4] sm:$0xf]
        %v1534 = vld [vmem:[#allocation3 + $0x8] sm:$0xf]
        %v1535 = vld [vmem:[#allocation3 + $0xc] sm:$0xf]
        %v1536 = vld [vmem:[#allocation3 + $0x10] sm:$0xf]
        %v1537 = vld [vmem:[#allocation3 + $0x14] sm:$0xf]
        %v1538 = vld [vmem:[#allocation3 + $0x18] sm:$0xf]
        %v1539 = vld [vmem:[#allocation3 + $0x1c] sm:$0xf]
        %v1540 = vld [vmem:[#allocation3 + $0x20] sm:$0xf]
        %v1541 = vld [vmem:[#allocation3 + $0x24] sm:$0xf]
        %v1542 = vld [vmem:[#allocation3 + $0x28] sm:$0xf]
        %v1543 = vld [vmem:[#allocation3 + $0x2c] sm:$0xf]
        %v1544 = vld [vmem:[#allocation3 + $0x30] sm:$0xf]
        %v1545 = vld [vmem:[#allocation3 + $0x34] sm:$0xf]
        %v1546 = vld [vmem:[#allocation3 + $0x38] sm:$0xf]
        %v1547 = vld [vmem:[#allocation3 + $0x3c] sm:$0xf]
        %v1548 = vld [vmem:[#allocation3 + $0x40] sm:$0xf]
        %v1549 = vld [vmem:[#allocation3 + $0x44] sm:$0xf]
        %v1550 = vld [vmem:[#allocation3 + $0x48] sm:$0xf]
        %v1551 = vld [vmem:[#allocation3 + $0x4c] sm:$0xf]
        %v1552 = vld [vmem:[#allocation3 + $0x50] sm:$0xf]
        %v1553 = vld [vmem:[#allocation3 + $0x54] sm:$0xf]
        %v1554 = vld [vmem:[#allocation3 + $0x58] sm:$0xf]
        %v1555 = vld [vmem:[#allocation3 + $0x5c] sm:$0xf]
        %v1556 = vld [vmem:[#allocation3 + $0x60] sm:$0xf]
        %v1557 = vld [vmem:[#allocation3 + $0x64] sm:$0xf]
        %v1558 = vld [vmem:[#allocation3 + $0x68] sm:$0xf]
        %v1559 = vld [vmem:[#allocation3 + $0x6c] sm:$0xf]
        %v1560 = vld [vmem:[#allocation3 + $0x70] sm:$0xf]
        %v1561 = vld [vmem:[#allocation3 + $0x74] sm:$0xf]
        %v1562 = vld [vmem:[#allocation3 + $0x78] sm:$0xf]
        %v1563 = vld [vmem:[#allocation3 + $0x7c] sm:$0xf]
        %v1565 = vlaneseq
        %v1566 = vshrl.u32 %v1565, 7
        %v1567 = vsub.s32 0, %v1566
        %v1568 = vrot.slane %v1493, %v1567
        %v1602 = vunpack.c.l.b16 %v1532
        %v1603 = vunpack.c.l.b16 %v1533
        %v1604 = vunpack.c.l.b16 %v1534
        %v1605 = vunpack.c.l.b16 %v1535
        %v1606 = vunpack.c.l.b16 %v1536
        %v1607 = vunpack.c.l.b16 %v1537
        %v1608 = vunpack.c.l.b16 %v1538
        %v1609 = vunpack.c.l.b16 %v1539
        %v1610 = vunpack.c.l.b16 %v1540
        %v1611 = vunpack.c.l.b16 %v1541
        %v1612 = vunpack.c.l.b16 %v1542
        %v1613 = vunpack.c.l.b16 %v1543
        %v1614 = vunpack.c.l.b16 %v1544
        %v1615 = vunpack.c.l.b16 %v1545
        %v1616 = vunpack.c.l.b16 %v1546
        %v1617 = vunpack.c.l.b16 %v1547
        %v1618 = vunpack.c.l.b16 %v1548
        %v1619 = vunpack.c.l.b16 %v1549
        %v1620 = vunpack.c.l.b16 %v1550
        %v1621 = vunpack.c.l.b16 %v1551
        %v1622 = vunpack.c.l.b16 %v1552
        %v1623 = vunpack.c.l.b16 %v1553
        %v1624 = vunpack.c.l.b16 %v1554
        %v1625 = vunpack.c.l.b16 %v1555
        %v1626 = vunpack.c.l.b16 %v1556
        %v1627 = vunpack.c.l.b16 %v1557
        %v1628 = vunpack.c.l.b16 %v1558
        %v1629 = vunpack.c.l.b16 %v1559
        %v1630 = vunpack.c.l.b16 %v1560
        %v1631 = vunpack.c.l.b16 %v1561
        %v1632 = vunpack.c.l.b16 %v1562
        %v1633 = vunpack.c.l.b16 %v1563
        %v1634 = vpack.c.b16 %v1603, %v1602
        %v1635 = vpack.c.b16 %v1605, %v1604
        %v1636 = vpack.c.b16 %v1607, %v1606
        %v1637 = vpack.c.b16 %v1609, %v1608
        %v1638 = vpack.c.b16 %v1611, %v1610
        %v1639 = vpack.c.b16 %v1613, %v1612
        %v1640 = vpack.c.b16 %v1615, %v1614
        %v1641 = vpack.c.b16 %v1617, %v1616
        %v1642 = vpack.c.b16 %v1619, %v1618
        %v1643 = vpack.c.b16 %v1621, %v1620
        %v1644 = vpack.c.b16 %v1623, %v1622
        %v1645 = vpack.c.b16 %v1625, %v1624
        %v1646 = vpack.c.b16 %v1627, %v1626
        %v1647 = vpack.c.b16 %v1629, %v1628
        %v1648 = vpack.c.b16 %v1631, %v1630
        %v1649 = vpack.c.b16 %v1633, %v1632
        %v1682 = vunpack.c.l.b16 %v1496
        %v1683 = vunpack.c.l.b16 %v1497
        %v1684 = vunpack.c.l.b16 %v1498
        %v1685 = vunpack.c.l.b16 %v1499
        %v1686 = vunpack.c.l.b16 %v1500
        %v1687 = vunpack.c.l.b16 %v1501
        %v1688 = vunpack.c.l.b16 %v1502
        %v1689 = vunpack.c.l.b16 %v1503
        %v1690 = vunpack.c.l.b16 %v1504
        %v1691 = vunpack.c.l.b16 %v1505
        %v1692 = vunpack.c.l.b16 %v1506
        %v1693 = vunpack.c.l.b16 %v1507
        %v1694 = vunpack.c.l.b16 %v1508
        %v1695 = vunpack.c.l.b16 %v1509
        %v1696 = vunpack.c.l.b16 %v1510
        %v1697 = vunpack.c.l.b16 %v1511
        %v1698 = vpack.c.b16 %v1683, %v1682
        %v1699 = vpack.c.b16 %v1685, %v1684
        %v1700 = vpack.c.b16 %v1687, %v1686
        %v1701 = vpack.c.b16 %v1689, %v1688
        %v1702 = vpack.c.b16 %v1691, %v1690
        %v1703 = vpack.c.b16 %v1693, %v1692
        %v1704 = vpack.c.b16 %v1695, %v1694
        %v1705 = vpack.c.b16 %v1697, %v1696
        %1714 = vmatprep.subr.bf16.mxu0 0
        %1715 = vmatpush1.bf16.msra.mxu0 %v1705
        %1716 = vmatprep.subr.bf16.mxu0 0
        %1717 = vmatpush1.bf16.msra.mxu0 %v1704
        %1718 = vmatprep.subr.bf16.mxu0 0
        %1719 = vmatpush1.bf16.msra.mxu0 %v1703
        %1720 = vmatprep.subr.bf16.mxu0 0
        %1721 = vmatpush1.bf16.msra.mxu0 %v1702
        %1722 = vmatprep.subr.bf16.mxu0 0
        %1723 = vmatpush1.bf16.msra.mxu0 %v1701
        %1724 = vmatprep.subr.bf16.mxu0 0
        %1725 = vmatpush1.bf16.msra.mxu0 %v1700
        %1726 = vmatprep.subr.bf16.mxu0 0
        %1727 = vmatpush1.bf16.msra.mxu0 %v1699
        %1728 = vmatprep.subr.bf16.mxu0 0
        %1729 = vmatpush1.bf16.msra.mxu0 %v1698
        %1730 = vmatprep.subr.bf16.mxu0 0
        %1731 = vmatpush2.bf16.msra.mxu0 0
        %1732 = vmatprep.subr.bf16.mxu0 0
        %1733 = vmatpush2.bf16.msra.mxu0 0
        %1734 = vmatprep.subr.bf16.mxu0 0
        %1735 = vmatpush2.bf16.msra.mxu0 0
        %1736 = vmatprep.subr.bf16.mxu0 0
        %1737 = vmatpush2.bf16.msra.mxu0 0
        %1738 = vmatprep.subr.bf16.mxu0 0
        %1739 = vmatpush2.bf16.msra.mxu0 0
        %1740 = vmatprep.subr.bf16.mxu0 0
        %1741 = vmatpush2.bf16.msra.mxu0 0
        %1742 = vmatprep.subr.bf16.mxu0 0
        %1743 = vmatpush2.bf16.msra.mxu0 0
        %1744 = vmatprep.subr.bf16.mxu0 0
        %1745 = vmatpush2.bf16.msra.mxu0 0
        %1746 = vmatprep.mubr.bf16.mxu0 0
        %1747 = vmatmul.mubr.bf16.gmra.mxu0 %v1634
        %v1748 = vpop.f32.mrf.mxu0
        %v1749 = vadd.f32 %v1568, %v1748
        %v1750 = vpop.f32.mrf.mxu0
        %v1751 = vpop.f32.mrf.mxu0
        %v1752 = vadd.f32 %v1568, %v1751
        %v1753 = vpop.f32.mrf.mxu0
        %1754 = vmatprep.mubr.bf16.mxu0 0
        %1755 = vmatmul.mubr.bf16.gmra.mxu0 %v1635
        %v1756 = vpop.f32.mrf.mxu0
        %v1757 = vadd.f32 %v1568, %v1756
        %v1758 = vpop.f32.mrf.mxu0
        %v1759 = vpop.f32.mrf.mxu0
        %v1760 = vadd.f32 %v1568, %v1759
        %v1761 = vpop.f32.mrf.mxu0
        %1762 = vmatprep.mubr.bf16.mxu0 0
        %1763 = vmatmul.mubr.bf16.gmra.mxu0 %v1636
        %v1764 = vpop.f32.mrf.mxu0
        %v1765 = vadd.f32 %v1568, %v1764
        %v1766 = vpop.f32.mrf.mxu0
        %v1767 = vpop.f32.mrf.mxu0
        %v1768 = vadd.f32 %v1568, %v1767
        %v1769 = vpop.f32.mrf.mxu0
        %1770 = vmatprep.mubr.bf16.mxu0 0
        %1771 = vmatmul.mubr.bf16.gmra.mxu0 %v1637
        %v1772 = vpop.f32.mrf.mxu0
        %v1773 = vadd.f32 %v1568, %v1772
        %v1774 = vpop.f32.mrf.mxu0
        %v1775 = vpop.f32.mrf.mxu0
        %v1776 = vadd.f32 %v1568, %v1775
        %v1777 = vpop.f32.mrf.mxu0
        %1778 = vmatprep.mubr.bf16.mxu0 0
        %1779 = vmatmul.mubr.bf16.gmra.mxu0 %v1638
        %v1780 = vpop.f32.mrf.mxu0
        %v1781 = vadd.f32 %v1568, %v1780
        %v1782 = vpop.f32.mrf.mxu0
        %v1783 = vpop.f32.mrf.mxu0
        %v1784 = vadd.f32 %v1568, %v1783
        %v1785 = vpop.f32.mrf.mxu0
        %1786 = vmatprep.mubr.bf16.mxu0 0
        %1787 = vmatmul.mubr.bf16.gmra.mxu0 %v1639
        %v1788 = vpop.f32.mrf.mxu0
        %v1789 = vadd.f32 %v1568, %v1788
        %v1790 = vpop.f32.mrf.mxu0
        %v1791 = vpop.f32.mrf.mxu0
        %v1792 = vadd.f32 %v1568, %v1791
        %v1793 = vpop.f32.mrf.mxu0
        %1794 = vmatprep.mubr.bf16.mxu0 0
        %1795 = vmatmul.mubr.bf16.gmra.mxu0 %v1640
        %v1796 = vpop.f32.mrf.mxu0
        %v1797 = vadd.f32 %v1568, %v1796
        %v1798 = vpop.f32.mrf.mxu0
        %v1799 = vpop.f32.mrf.mxu0
        %v1800 = vadd.f32 %v1568, %v1799
        %v1801 = vpop.f32.mrf.mxu0
        %1802 = vmatprep.mubr.bf16.mxu0 0
        %1803 = vmatmul.mubr.bf16.gmra.mxu0 %v1641
        %v1804 = vpop.f32.mrf.mxu0
        %v1805 = vadd.f32 %v1568, %v1804
        %v1806 = vpop.f32.mrf.mxu0
        %v1807 = vpop.f32.mrf.mxu0
        %v1808 = vadd.f32 %v1568, %v1807
        %v1809 = vpop.f32.mrf.mxu0
        %1810 = vmatprep.mubr.bf16.mxu0 0
        %1811 = vmatmul.mubr.bf16.gmra.mxu0 %v1642
        %v1812 = vpop.f32.mrf.mxu0
        %v1813 = vadd.f32 %v1568, %v1812
        %v1814 = vpop.f32.mrf.mxu0
        %v1815 = vpop.f32.mrf.mxu0
        %v1816 = vadd.f32 %v1568, %v1815
        %v1817 = vpop.f32.mrf.mxu0
        %1818 = vmatprep.mubr.bf16.mxu0 0
        %1819 = vmatmul.mubr.bf16.gmra.mxu0 %v1643
        %v1820 = vpop.f32.mrf.mxu0
        %v1821 = vadd.f32 %v1568, %v1820
        %v1822 = vpop.f32.mrf.mxu0
        %v1823 = vpop.f32.mrf.mxu0
        %v1824 = vadd.f32 %v1568, %v1823
        %v1825 = vpop.f32.mrf.mxu0
        %1826 = vmatprep.mubr.bf16.mxu0 0
        %1827 = vmatmul.mubr.bf16.gmra.mxu0 %v1644
        %v1828 = vpop.f32.mrf.mxu0
        %v1829 = vadd.f32 %v1568, %v1828
        %v1830 = vpop.f32.mrf.mxu0
        %v1831 = vpop.f32.mrf.mxu0
        %v1832 = vadd.f32 %v1568, %v1831
        %v1833 = vpop.f32.mrf.mxu0
        %1834 = vmatprep.mubr.bf16.mxu0 0
        %1835 = vmatmul.mubr.bf16.gmra.mxu0 %v1645
        %v1836 = vpop.f32.mrf.mxu0
        %v1837 = vadd.f32 %v1568, %v1836
        %v1838 = vpop.f32.mrf.mxu0
        %v1839 = vpop.f32.mrf.mxu0
        %v1840 = vadd.f32 %v1568, %v1839
        %v1841 = vpop.f32.mrf.mxu0
        %1842 = vmatprep.mubr.bf16.mxu0 0
        %1843 = vmatmul.mubr.bf16.gmra.mxu0 %v1646
        %v1844 = vpop.f32.mrf.mxu0
        %v1845 = vadd.f32 %v1568, %v1844
        %v1846 = vpop.f32.mrf.mxu0
        %v1847 = vpop.f32.mrf.mxu0
        %v1848 = vadd.f32 %v1568, %v1847
        %v1849 = vpop.f32.mrf.mxu0
        %1850 = vmatprep.mubr.bf16.mxu0 0
        %1851 = vmatmul.mubr.bf16.gmra.mxu0 %v1647
        %v1852 = vpop.f32.mrf.mxu0
        %v1853 = vadd.f32 %v1568, %v1852
        %v1854 = vpop.f32.mrf.mxu0
        %v1855 = vpop.f32.mrf.mxu0
        %v1856 = vadd.f32 %v1568, %v1855
        %v1857 = vpop.f32.mrf.mxu0
        %1858 = vmatprep.mubr.bf16.mxu0 0
        %1859 = vmatmul.mubr.bf16.gmra.mxu0 %v1648
        %v1860 = vpop.f32.mrf.mxu0
        %v1861 = vadd.f32 %v1568, %v1860
        %v1862 = vpop.f32.mrf.mxu0
        %v1863 = vpop.f32.mrf.mxu0
        %v1864 = vadd.f32 %v1568, %v1863
        %v1865 = vpop.f32.mrf.mxu0
        %1866 = vmatprep.mubr.bf16.mxu0 0
        %1867 = vmatmul.mubr.bf16.gmra.mxu0 %v1649
        %v1868 = vpop.f32.mrf.mxu0
        %v1869 = vadd.f32 %v1568, %v1868
        %v1870 = vpop.f32.mrf.mxu0
        %v1871 = vpop.f32.mrf.mxu0
        %v1872 = vadd.f32 %v1568, %v1871
        %v1873 = vpop.f32.mrf.mxu0
        %1874 = vdwg.mxu0
        %v1875 = vmul.f32 %v1749, %v1749
        %v1876 = vmul.f32 %v1752, %v1752
        %v1877 = vmul.f32 %v1757, %v1757
        %v1878 = vmul.f32 %v1760, %v1760
        %v1879 = vmul.f32 %v1765, %v1765
        %v1880 = vmul.f32 %v1768, %v1768
        %v1881 = vmul.f32 %v1773, %v1773
        %v1882 = vmul.f32 %v1776, %v1776
        %v1883 = vmul.f32 %v1781, %v1781
        %v1884 = vmul.f32 %v1784, %v1784
        %v1885 = vmul.f32 %v1789, %v1789
        %v1886 = vmul.f32 %v1792, %v1792
        %v1887 = vmul.f32 %v1797, %v1797
        %v1888 = vmul.f32 %v1800, %v1800
        %v1889 = vmul.f32 %v1805, %v1805
        %v1890 = vmul.f32 %v1808, %v1808
        %v1891 = vmul.f32 %v1813, %v1813
        %v1892 = vmul.f32 %v1816, %v1816
        %v1893 = vmul.f32 %v1821, %v1821
        %v1894 = vmul.f32 %v1824, %v1824
        %v1895 = vmul.f32 %v1829, %v1829
        %v1896 = vmul.f32 %v1832, %v1832
        %v1897 = vmul.f32 %v1837, %v1837
        %v1898 = vmul.f32 %v1840, %v1840
        %v1899 = vmul.f32 %v1845, %v1845
        %v1900 = vmul.f32 %v1848, %v1848
        %v1901 = vmul.f32 %v1853, %v1853
        %v1902 = vmul.f32 %v1856, %v1856
        %v1903 = vmul.f32 %v1861, %v1861
        %v1904 = vmul.f32 %v1864, %v1864
        %v1905 = vmul.f32 %v1869, %v1869
        %v1906 = vmul.f32 %v1872, %v1872
        %v1907 = vmul.f32 %v1749, %v1875
        %v1908 = vmul.f32 %v1752, %v1876
        %v1909 = vmul.f32 %v1757, %v1877
        %v1910 = vmul.f32 %v1760, %v1878
        %v1911 = vmul.f32 %v1765, %v1879
        %v1912 = vmul.f32 %v1768, %v1880
        %v1913 = vmul.f32 %v1773, %v1881
        %v1914 = vmul.f32 %v1776, %v1882
        %v1915 = vmul.f32 %v1781, %v1883
        %v1916 = vmul.f32 %v1784, %v1884
        %v1917 = vmul.f32 %v1789, %v1885
        %v1918 = vmul.f32 %v1792, %v1886
        %v1919 = vmul.f32 %v1797, %v1887
        %v1920 = vmul.f32 %v1800, %v1888
        %v1921 = vmul.f32 %v1805, %v1889
        %v1922 = vmul.f32 %v1808, %v1890
        %v1923 = vmul.f32 %v1813, %v1891
        %v1924 = vmul.f32 %v1816, %v1892
        %v1925 = vmul.f32 %v1821, %v1893
        %v1926 = vmul.f32 %v1824, %v1894
        %v1927 = vmul.f32 %v1829, %v1895
        %v1928 = vmul.f32 %v1832, %v1896
        %v1929 = vmul.f32 %v1837, %v1897
        %v1930 = vmul.f32 %v1840, %v1898
        %v1931 = vmul.f32 %v1845, %v1899
        %v1932 = vmul.f32 %v1848, %v1900
        %v1933 = vmul.f32 %v1853, %v1901
        %v1934 = vmul.f32 %v1856, %v1902
        %v1935 = vmul.f32 %v1861, %v1903
        %v1936 = vmul.f32 %v1864, %v1904
        %v1937 = vmul.f32 %v1869, %v1905
        %v1938 = vmul.f32 %v1872, %v1906
        %v1939 = vmul.f32 %v1907, 0.044715
        %v1940 = vmul.f32 %v1908, 0.044715
        %v1941 = vmul.f32 %v1909, 0.044715
        %v1942 = vmul.f32 %v1910, 0.044715
        %v1943 = vmul.f32 %v1911, 0.044715
        %v1944 = vmul.f32 %v1912, 0.044715
        %v1945 = vmul.f32 %v1913, 0.044715
        %v1946 = vmul.f32 %v1914, 0.044715
        %v1947 = vmul.f32 %v1915, 0.044715
        %v1948 = vmul.f32 %v1916, 0.044715
        %v1949 = vmul.f32 %v1917, 0.044715
        %v1950 = vmul.f32 %v1918, 0.044715
        %v1951 = vmul.f32 %v1919, 0.044715
        %v1952 = vmul.f32 %v1920, 0.044715
        %v1953 = vmul.f32 %v1921, 0.044715
        %v1954 = vmul.f32 %v1922, 0.044715
        %v1955 = vmul.f32 %v1923, 0.044715
        %v1956 = vmul.f32 %v1924, 0.044715
        %v1957 = vmul.f32 %v1925, 0.044715
        %v1958 = vmul.f32 %v1926, 0.044715
        %v1959 = vmul.f32 %v1927, 0.044715
        %v1960 = vmul.f32 %v1928, 0.044715
        %v1961 = vmul.f32 %v1929, 0.044715
        %v1962 = vmul.f32 %v1930, 0.044715
        %v1963 = vmul.f32 %v1931, 0.044715
        %v1964 = vmul.f32 %v1932, 0.044715
        %v1965 = vmul.f32 %v1933, 0.044715
        %v1966 = vmul.f32 %v1934, 0.044715
        %v1967 = vmul.f32 %v1935, 0.044715
        %v1968 = vmul.f32 %v1936, 0.044715
        %v1969 = vmul.f32 %v1937, 0.044715
        %v1970 = vmul.f32 %v1938, 0.044715
        %v1971 = vadd.f32 %v1749, %v1939
        %v1972 = vadd.f32 %v1752, %v1940
        %v1973 = vadd.f32 %v1757, %v1941
        %v1974 = vadd.f32 %v1760, %v1942
        %v1975 = vadd.f32 %v1765, %v1943
        %v1976 = vadd.f32 %v1768, %v1944
        %v1977 = vadd.f32 %v1773, %v1945
        %v1978 = vadd.f32 %v1776, %v1946
        %v1979 = vadd.f32 %v1781, %v1947
        %v1980 = vadd.f32 %v1784, %v1948
        %v1981 = vadd.f32 %v1789, %v1949
        %v1982 = vadd.f32 %v1792, %v1950
        %v1983 = vadd.f32 %v1797, %v1951
        %v1984 = vadd.f32 %v1800, %v1952
        %v1985 = vadd.f32 %v1805, %v1953
        %v1986 = vadd.f32 %v1808, %v1954
        %v1987 = vadd.f32 %v1813, %v1955
        %v1988 = vadd.f32 %v1816, %v1956
        %v1989 = vadd.f32 %v1821, %v1957
        %v1990 = vadd.f32 %v1824, %v1958
        %v1991 = vadd.f32 %v1829, %v1959
        %v1992 = vadd.f32 %v1832, %v1960
        %v1993 = vadd.f32 %v1837, %v1961
        %v1994 = vadd.f32 %v1840, %v1962
        %v1995 = vadd.f32 %v1845, %v1963
        %v1996 = vadd.f32 %v1848, %v1964
        %v1997 = vadd.f32 %v1853, %v1965
        %v1998 = vadd.f32 %v1856, %v1966
        %v1999 = vadd.f32 %v1861, %v1967
        %v2000 = vadd.f32 %v1864, %v1968
        %v2001 = vadd.f32 %v1869, %v1969
        %v2002 = vadd.f32 %v1872, %v1970
        %v2003 = vmul.f32 %v1971, 0.7978846
        %v2004 = vmul.f32 %v1972, 0.7978846
        %v2005 = vmul.f32 %v1973, 0.7978846
        %v2006 = vmul.f32 %v1974, 0.7978846
        %v2007 = vmul.f32 %v1975, 0.7978846
        %v2008 = vmul.f32 %v1976, 0.7978846
        %v2009 = vmul.f32 %v1977, 0.7978846
        %v2010 = vmul.f32 %v1978, 0.7978846
        %v2011 = vmul.f32 %v1979, 0.7978846
        %v2012 = vmul.f32 %v1980, 0.7978846
        %v2013 = vmul.f32 %v1981, 0.7978846
        %v2014 = vmul.f32 %v1982, 0.7978846
        %v2015 = vmul.f32 %v1983, 0.7978846
        %v2016 = vmul.f32 %v1984, 0.7978846
        %v2017 = vmul.f32 %v1985, 0.7978846
        %v2018 = vmul.f32 %v1986, 0.7978846
        %v2019 = vmul.f32 %v1987, 0.7978846
        %v2020 = vmul.f32 %v1988, 0.7978846
        %v2021 = vmul.f32 %v1989, 0.7978846
        %v2022 = vmul.f32 %v1990, 0.7978846
        %v2023 = vmul.f32 %v1991, 0.7978846
        %v2024 = vmul.f32 %v1992, 0.7978846
        %v2025 = vmul.f32 %v1993, 0.7978846
        %v2026 = vmul.f32 %v1994, 0.7978846
        %v2027 = vmul.f32 %v1995, 0.7978846
        %v2028 = vmul.f32 %v1996, 0.7978846
        %v2029 = vmul.f32 %v1997, 0.7978846
        %v2030 = vmul.f32 %v1998, 0.7978846
        %v2031 = vmul.f32 %v1999, 0.7978846
        %v2032 = vmul.f32 %v2000, 0.7978846
        %v2033 = vmul.f32 %v2001, 0.7978846
        %v2034 = vmul.f32 %v2002, 0.7978846
        %v2035 = vtanh.pop %v2003
        %v2036 = vtanh.pop %v2004
        %v2037 = vtanh.pop %v2005
        %v2038 = vtanh.pop %v2006
        %v2039 = vtanh.pop %v2007
        %v2040 = vtanh.pop %v2008
        %v2041 = vtanh.pop %v2009
        %v2042 = vtanh.pop %v2010
        %v2043 = vtanh.pop %v2011
        %v2044 = vtanh.pop %v2012
        %v2045 = vtanh.pop %v2013
        %v2046 = vtanh.pop %v2014
        %v2047 = vtanh.pop %v2015
        %v2048 = vtanh.pop %v2016
        %v2049 = vtanh.pop %v2017
        %v2050 = vtanh.pop %v2018
        %v2051 = vtanh.pop %v2019
        %v2052 = vtanh.pop %v2020
        %v2053 = vtanh.pop %v2021
        %v2054 = vtanh.pop %v2022
        %v2055 = vtanh.pop %v2023
        %v2056 = vtanh.pop %v2024
        %v2057 = vtanh.pop %v2025
        %v2058 = vtanh.pop %v2026
        %v2059 = vtanh.pop %v2027
        %v2060 = vtanh.pop %v2028
        %v2061 = vtanh.pop %v2029
        %v2062 = vtanh.pop %v2030
        %v2063 = vtanh.pop %v2031
        %v2064 = vtanh.pop %v2032
        %v2065 = vtanh.pop %v2033
        %v2066 = vtanh.pop %v2034
        %v2067 = vadd.f32 %v2035, 1.0
        %v2068 = vadd.f32 %v2036, 1.0
        %v2069 = vadd.f32 %v2037, 1.0
        %v2070 = vadd.f32 %v2038, 1.0
        %v2071 = vadd.f32 %v2039, 1.0
        %v2072 = vadd.f32 %v2040, 1.0
        %v2073 = vadd.f32 %v2041, 1.0
        %v2074 = vadd.f32 %v2042, 1.0
        %v2075 = vadd.f32 %v2043, 1.0
        %v2076 = vadd.f32 %v2044, 1.0
        %v2077 = vadd.f32 %v2045, 1.0
        %v2078 = vadd.f32 %v2046, 1.0
        %v2079 = vadd.f32 %v2047, 1.0
        %v2080 = vadd.f32 %v2048, 1.0
        %v2081 = vadd.f32 %v2049, 1.0
        %v2082 = vadd.f32 %v2050, 1.0
        %v2083 = vadd.f32 %v2051, 1.0
        %v2084 = vadd.f32 %v2052, 1.0
        %v2085 = vadd.f32 %v2053, 1.0
        %v2086 = vadd.f32 %v2054, 1.0
        %v2087 = vadd.f32 %v2055, 1.0
        %v2088 = vadd.f32 %v2056, 1.0
        %v2089 = vadd.f32 %v2057, 1.0
        %v2090 = vadd.f32 %v2058, 1.0
        %v2091 = vadd.f32 %v2059, 1.0
        %v2092 = vadd.f32 %v2060, 1.0
        %v2093 = vadd.f32 %v2061, 1.0
        %v2094 = vadd.f32 %v2062, 1.0
        %v2095 = vadd.f32 %v2063, 1.0
        %v2096 = vadd.f32 %v2064, 1.0
        %v2097 = vadd.f32 %v2065, 1.0
        %v2098 = vadd.f32 %v2066, 1.0
        %v2099 = vmul.f32 %v2067, 0.5
        %v2100 = vmul.f32 %v2068, 0.5
        %v2101 = vmul.f32 %v2069, 0.5
        %v2102 = vmul.f32 %v2070, 0.5
        %v2103 = vmul.f32 %v2071, 0.5
        %v2104 = vmul.f32 %v2072, 0.5
        %v2105 = vmul.f32 %v2073, 0.5
        %v2106 = vmul.f32 %v2074, 0.5
        %v2107 = vmul.f32 %v2075, 0.5
        %v2108 = vmul.f32 %v2076, 0.5
        %v2109 = vmul.f32 %v2077, 0.5
        %v2110 = vmul.f32 %v2078, 0.5
        %v2111 = vmul.f32 %v2079, 0.5
        %v2112 = vmul.f32 %v2080, 0.5
        %v2113 = vmul.f32 %v2081, 0.5
        %v2114 = vmul.f32 %v2082, 0.5
        %v2115 = vmul.f32 %v2083, 0.5
        %v2116 = vmul.f32 %v2084, 0.5
        %v2117 = vmul.f32 %v2085, 0.5
        %v2118 = vmul.f32 %v2086, 0.5
        %v2119 = vmul.f32 %v2087, 0.5
        %v2120 = vmul.f32 %v2088, 0.5
        %v2121 = vmul.f32 %v2089, 0.5
        %v2122 = vmul.f32 %v2090, 0.5
        %v2123 = vmul.f32 %v2091, 0.5
        %v2124 = vmul.f32 %v2092, 0.5
        %v2125 = vmul.f32 %v2093, 0.5
        %v2126 = vmul.f32 %v2094, 0.5
        %v2127 = vmul.f32 %v2095, 0.5
        %v2128 = vmul.f32 %v2096, 0.5
        %v2129 = vmul.f32 %v2097, 0.5
        %v2130 = vmul.f32 %v2098, 0.5
        %v2131 = vmul.f32 %v1749, %v2099
        %v2132 = vmul.f32 %v1752, %v2100
        %v2133 = vmul.f32 %v1757, %v2101
        %v2134 = vmul.f32 %v1760, %v2102
        %v2135 = vmul.f32 %v1765, %v2103
        %v2136 = vmul.f32 %v1768, %v2104
        %v2137 = vmul.f32 %v1773, %v2105
        %v2138 = vmul.f32 %v1776, %v2106
        %v2139 = vmul.f32 %v1781, %v2107
        %v2140 = vmul.f32 %v1784, %v2108
        %v2141 = vmul.f32 %v1789, %v2109
        %v2142 = vmul.f32 %v1792, %v2110
        %v2143 = vmul.f32 %v1797, %v2111
        %v2144 = vmul.f32 %v1800, %v2112
        %v2145 = vmul.f32 %v1805, %v2113
        %v2146 = vmul.f32 %v1808, %v2114
        %v2147 = vmul.f32 %v1813, %v2115
        %v2148 = vmul.f32 %v1816, %v2116
        %v2149 = vmul.f32 %v1821, %v2117
        %v2150 = vmul.f32 %v1824, %v2118
        %v2151 = vmul.f32 %v1829, %v2119
        %v2152 = vmul.f32 %v1832, %v2120
        %v2153 = vmul.f32 %v1837, %v2121
        %v2154 = vmul.f32 %v1840, %v2122
        %v2155 = vmul.f32 %v1845, %v2123
        %v2156 = vmul.f32 %v1848, %v2124
        %v2157 = vmul.f32 %v1853, %v2125
        %v2158 = vmul.f32 %v1856, %v2126
        %v2159 = vmul.f32 %v1861, %v2127
        %v2160 = vmul.f32 %v1864, %v2128
        %v2161 = vmul.f32 %v1869, %v2129
        %v2162 = vmul.f32 %v1872, %v2130
        %v2163 = vld [vmem:[%s230] sm:$0xff]
        %v2164 = vld [vmem:[%s230 + $0x8] sm:$0xff]
        %v2165 = vld [vmem:[%s230 + $0x10] sm:$0xff]
        %v2166 = vld [vmem:[%s230 + $0x18] sm:$0xff]
        %v2167 = vld [vmem:[%s230 + $0x20] sm:$0xff]
        %v2168 = vld [vmem:[%s230 + $0x28] sm:$0xff]
        %v2169 = vld [vmem:[%s230 + $0x30] sm:$0xff]
        %v2170 = vld [vmem:[%s230 + $0x38] sm:$0xff]
        %v2171 = vld [vmem:[%s230 + $0x40] sm:$0xff]
        %v2172 = vld [vmem:[%s230 + $0x48] sm:$0xff]
        %v2173 = vld [vmem:[%s230 + $0x50] sm:$0xff]
        %v2174 = vld [vmem:[%s230 + $0x58] sm:$0xff]
        %v2175 = vld [vmem:[%s230 + $0x60] sm:$0xff]
        %v2176 = vld [vmem:[%s230 + $0x68] sm:$0xff]
        %v2177 = vld [vmem:[%s230 + $0x70] sm:$0xff]
        %v2178 = vld [vmem:[%s230 + $0x78] sm:$0xff]
        %v2179 = vld [vmem:[%s230 + $0x80] sm:$0xff]
        %v2180 = vld [vmem:[%s230 + $0x88] sm:$0xff]
        %v2181 = vld [vmem:[%s230 + $0x90] sm:$0xff]
        %v2182 = vld [vmem:[%s230 + $0x98] sm:$0xff]
        %v2183 = vld [vmem:[%s230 + $0xa0] sm:$0xff]
        %v2184 = vld [vmem:[%s230 + $0xa8] sm:$0xff]
        %v2185 = vld [vmem:[%s230 + $0xb0] sm:$0xff]
        %v2186 = vld [vmem:[%s230 + $0xb8] sm:$0xff]
        %v2187 = vld [vmem:[%s230 + $0xc0] sm:$0xff]
        %v2188 = vld [vmem:[%s230 + $0xc8] sm:$0xff]
        %v2189 = vld [vmem:[%s230 + $0xd0] sm:$0xff]
        %v2190 = vld [vmem:[%s230 + $0xd8] sm:$0xff]
        %v2191 = vld [vmem:[%s230 + $0xe0] sm:$0xff]
        %v2192 = vld [vmem:[%s230 + $0xe8] sm:$0xff]
        %v2193 = vld [vmem:[%s230 + $0xf0] sm:$0xff]
        %v2194 = vld [vmem:[%s230 + $0xf8] sm:$0xff]
        %v2195 = vpack.c.bf16 %v2132, %v2131
        %v2196 = vpack.c.bf16 %v2134, %v2133
        %v2197 = vpack.c.bf16 %v2136, %v2135
        %v2198 = vpack.c.bf16 %v2138, %v2137
        %v2199 = vpack.c.bf16 %v2140, %v2139
        %v2200 = vpack.c.bf16 %v2142, %v2141
        %v2201 = vpack.c.bf16 %v2144, %v2143
        %v2202 = vpack.c.bf16 %v2146, %v2145
        %v2203 = vpack.c.bf16 %v2148, %v2147
        %v2204 = vpack.c.bf16 %v2150, %v2149
        %v2205 = vpack.c.bf16 %v2152, %v2151
        %v2206 = vpack.c.bf16 %v2154, %v2153
        %v2207 = vpack.c.bf16 %v2156, %v2155
        %v2208 = vpack.c.bf16 %v2158, %v2157
        %v2209 = vpack.c.bf16 %v2160, %v2159
        %v2210 = vpack.c.bf16 %v2162, %v2161
        %v2227 = vunpack.c.l.b16 %v1516
        %v2228 = vunpack.c.l.b16 %v1517
        %v2229 = vunpack.c.l.b16 %v1518
        %v2230 = vunpack.c.l.b16 %v1519
        %v2231 = vunpack.c.l.b16 %v1520
        %v2232 = vunpack.c.l.b16 %v1521
        %v2233 = vunpack.c.l.b16 %v1522
        %v2234 = vunpack.c.l.b16 %v1523
        %v2235 = vunpack.c.l.b16 %v1524
        %v2236 = vunpack.c.l.b16 %v1525
        %v2237 = vunpack.c.l.b16 %v1526
        %v2238 = vunpack.c.l.b16 %v1527
        %v2239 = vunpack.c.l.b16 %v1528
        %v2240 = vunpack.c.l.b16 %v1529
        %v2241 = vunpack.c.l.b16 %v1530
        %v2242 = vunpack.c.l.b16 %v1531
        %v2243 = vpack.c.b16 %v2228, %v2227
        %v2244 = vpack.c.b16 %v2230, %v2229
        %v2245 = vpack.c.b16 %v2232, %v2231
        %v2246 = vpack.c.b16 %v2234, %v2233
        %v2247 = vpack.c.b16 %v2236, %v2235
        %v2248 = vpack.c.b16 %v2238, %v2237
        %v2249 = vpack.c.b16 %v2240, %v2239
        %v2250 = vpack.c.b16 %v2242, %v2241
        %2259 = vmatprep.subr.bf16.mxu0 0
        %2260 = vmatpush1.bf16.msra.mxu0 %v2250
        %2261 = vmatprep.subr.bf16.mxu0 0
        %2262 = vmatpush1.bf16.msra.mxu0 %v2249
        %2263 = vmatprep.subr.bf16.mxu0 0
        %2264 = vmatpush1.bf16.msra.mxu0 %v2248
        %2265 = vmatprep.subr.bf16.mxu0 0
        %2266 = vmatpush1.bf16.msra.mxu0 %v2247
        %2267 = vmatprep.subr.bf16.mxu0 0
        %2268 = vmatpush1.bf16.msra.mxu0 %v2246
        %2269 = vmatprep.subr.bf16.mxu0 0
        %2270 = vmatpush1.bf16.msra.mxu0 %v2245
        %2271 = vmatprep.subr.bf16.mxu0 0
        %2272 = vmatpush1.bf16.msra.mxu0 %v2244
        %2273 = vmatprep.subr.bf16.mxu0 0
        %2274 = vmatpush1.bf16.msra.mxu0 %v2243
        %2275 = vmatprep.subr.bf16.mxu0 0
        %2276 = vmatpush2.bf16.msra.mxu0 0
        %2277 = vmatprep.subr.bf16.mxu0 0
        %2278 = vmatpush2.bf16.msra.mxu0 0
        %2279 = vmatprep.subr.bf16.mxu0 0
        %2280 = vmatpush2.bf16.msra.mxu0 0
        %2281 = vmatprep.subr.bf16.mxu0 0
        %2282 = vmatpush2.bf16.msra.mxu0 0
        %2283 = vmatprep.subr.bf16.mxu0 0
        %2284 = vmatpush2.bf16.msra.mxu0 0
        %2285 = vmatprep.subr.bf16.mxu0 0
        %2286 = vmatpush2.bf16.msra.mxu0 0
        %2287 = vmatprep.subr.bf16.mxu0 0
        %2288 = vmatpush2.bf16.msra.mxu0 0
        %2289 = vmatprep.subr.bf16.mxu0 0
        %2290 = vmatpush2.bf16.msra.mxu0 0
        %2291 = vmatprep.mubr.bf16.mxu0 0
        %2292 = vmatmul.mubr.bf16.gmra.mxu0 %v2195
        %v2293 = vpop.f32.mrf.mxu0
        %v2294 = vadd.f32 0.0, %v2293
        %v2295 = vpop.f32.mrf.mxu0
        %v2296 = vpop.f32.mrf.mxu0
        %v2297 = vadd.f32 0.0, %v2296
        %v2298 = vpop.f32.mrf.mxu0
        %2299 = vmatprep.mubr.bf16.mxu0 0
        %2300 = vmatmul.mubr.bf16.gmra.mxu0 %v2196
        %v2301 = vpop.f32.mrf.mxu0
        %v2302 = vadd.f32 0.0, %v2301
        %v2303 = vpop.f32.mrf.mxu0
        %v2304 = vpop.f32.mrf.mxu0
        %v2305 = vadd.f32 0.0, %v2304
        %v2306 = vpop.f32.mrf.mxu0
        %2307 = vmatprep.mubr.bf16.mxu0 0
        %2308 = vmatmul.mubr.bf16.gmra.mxu0 %v2197
        %v2309 = vpop.f32.mrf.mxu0
        %v2310 = vadd.f32 0.0, %v2309
        %v2311 = vpop.f32.mrf.mxu0
        %v2312 = vpop.f32.mrf.mxu0
        %v2313 = vadd.f32 0.0, %v2312
        %v2314 = vpop.f32.mrf.mxu0
        %2315 = vmatprep.mubr.bf16.mxu0 0
        %2316 = vmatmul.mubr.bf16.gmra.mxu0 %v2198
        %v2317 = vpop.f32.mrf.mxu0
        %v2318 = vadd.f32 0.0, %v2317
        %v2319 = vpop.f32.mrf.mxu0
        %v2320 = vpop.f32.mrf.mxu0
        %v2321 = vadd.f32 0.0, %v2320
        %v2322 = vpop.f32.mrf.mxu0
        %2323 = vmatprep.mubr.bf16.mxu0 0
        %2324 = vmatmul.mubr.bf16.gmra.mxu0 %v2199
        %v2325 = vpop.f32.mrf.mxu0
        %v2326 = vadd.f32 0.0, %v2325
        %v2327 = vpop.f32.mrf.mxu0
        %v2328 = vpop.f32.mrf.mxu0
        %v2329 = vadd.f32 0.0, %v2328
        %v2330 = vpop.f32.mrf.mxu0
        %2331 = vmatprep.mubr.bf16.mxu0 0
        %2332 = vmatmul.mubr.bf16.gmra.mxu0 %v2200
        %v2333 = vpop.f32.mrf.mxu0
        %v2334 = vadd.f32 0.0, %v2333
        %v2335 = vpop.f32.mrf.mxu0
        %v2336 = vpop.f32.mrf.mxu0
        %v2337 = vadd.f32 0.0, %v2336
        %v2338 = vpop.f32.mrf.mxu0
        %2339 = vmatprep.mubr.bf16.mxu0 0
        %2340 = vmatmul.mubr.bf16.gmra.mxu0 %v2201
        %v2341 = vpop.f32.mrf.mxu0
        %v2342 = vadd.f32 0.0, %v2341
        %v2343 = vpop.f32.mrf.mxu0
        %v2344 = vpop.f32.mrf.mxu0
        %v2345 = vadd.f32 0.0, %v2344
        %v2346 = vpop.f32.mrf.mxu0
        %2347 = vmatprep.mubr.bf16.mxu0 0
        %2348 = vmatmul.mubr.bf16.gmra.mxu0 %v2202
        %v2349 = vpop.f32.mrf.mxu0
        %v2350 = vadd.f32 0.0, %v2349
        %v2351 = vpop.f32.mrf.mxu0
        %v2352 = vpop.f32.mrf.mxu0
        %v2353 = vadd.f32 0.0, %v2352
        %v2354 = vpop.f32.mrf.mxu0
        %2355 = vmatprep.mubr.bf16.mxu0 0
        %2356 = vmatmul.mubr.bf16.gmra.mxu0 %v2203
        %v2357 = vpop.f32.mrf.mxu0
        %v2358 = vadd.f32 0.0, %v2357
        %v2359 = vpop.f32.mrf.mxu0
        %v2360 = vpop.f32.mrf.mxu0
        %v2361 = vadd.f32 0.0, %v2360
        %v2362 = vpop.f32.mrf.mxu0
        %2363 = vmatprep.mubr.bf16.mxu0 0
        %2364 = vmatmul.mubr.bf16.gmra.mxu0 %v2204
        %v2365 = vpop.f32.mrf.mxu0
        %v2366 = vadd.f32 0.0, %v2365
        %v2367 = vpop.f32.mrf.mxu0
        %v2368 = vpop.f32.mrf.mxu0
        %v2369 = vadd.f32 0.0, %v2368
        %v2370 = vpop.f32.mrf.mxu0
        %2371 = vmatprep.mubr.bf16.mxu0 0
        %2372 = vmatmul.mubr.bf16.gmra.mxu0 %v2205
        %v2373 = vpop.f32.mrf.mxu0
        %v2374 = vadd.f32 0.0, %v2373
        %v2375 = vpop.f32.mrf.mxu0
        %v2376 = vpop.f32.mrf.mxu0
        %v2377 = vadd.f32 0.0, %v2376
        %v2378 = vpop.f32.mrf.mxu0
        %2379 = vmatprep.mubr.bf16.mxu0 0
        %2380 = vmatmul.mubr.bf16.gmra.mxu0 %v2206
        %v2381 = vpop.f32.mrf.mxu0
        %v2382 = vadd.f32 0.0, %v2381
        %v2383 = vpop.f32.mrf.mxu0
        %v2384 = vpop.f32.mrf.mxu0
        %v2385 = vadd.f32 0.0, %v2384
        %v2386 = vpop.f32.mrf.mxu0
        %2387 = vmatprep.mubr.bf16.mxu0 0
        %2388 = vmatmul.mubr.bf16.gmra.mxu0 %v2207
        %v2389 = vpop.f32.mrf.mxu0
        %v2390 = vadd.f32 0.0, %v2389
        %v2391 = vpop.f32.mrf.mxu0
        %v2392 = vpop.f32.mrf.mxu0
        %v2393 = vadd.f32 0.0, %v2392
        %v2394 = vpop.f32.mrf.mxu0
        %2395 = vmatprep.mubr.bf16.mxu0 0
        %2396 = vmatmul.mubr.bf16.gmra.mxu0 %v2208
        %v2397 = vpop.f32.mrf.mxu0
        %v2398 = vadd.f32 0.0, %v2397
        %v2399 = vpop.f32.mrf.mxu0
        %v2400 = vpop.f32.mrf.mxu0
        %v2401 = vadd.f32 0.0, %v2400
        %v2402 = vpop.f32.mrf.mxu0
        %2403 = vmatprep.mubr.bf16.mxu0 0
        %2404 = vmatmul.mubr.bf16.gmra.mxu0 %v2209
        %v2405 = vpop.f32.mrf.mxu0
        %v2406 = vadd.f32 0.0, %v2405
        %v2407 = vpop.f32.mrf.mxu0
        %v2408 = vpop.f32.mrf.mxu0
        %v2409 = vadd.f32 0.0, %v2408
        %v2410 = vpop.f32.mrf.mxu0
        %2411 = vmatprep.mubr.bf16.mxu0 0
        %2412 = vmatmul.mubr.bf16.gmra.mxu0 %v2210
        %v2413 = vpop.f32.mrf.mxu0
        %v2414 = vadd.f32 0.0, %v2413
        %v2415 = vpop.f32.mrf.mxu0
        %v2416 = vpop.f32.mrf.mxu0
        %v2417 = vadd.f32 0.0, %v2416
        %v2418 = vpop.f32.mrf.mxu0
        %2419 = vdwg.mxu0
        %v2420 = vadd.f32 %v2163, %v2294
        %v2421 = vadd.f32 %v2164, %v2297
        %v2422 = vadd.f32 %v2165, %v2302
        %v2423 = vadd.f32 %v2166, %v2305
        %v2424 = vadd.f32 %v2167, %v2310
        %v2425 = vadd.f32 %v2168, %v2313
        %v2426 = vadd.f32 %v2169, %v2318
        %v2427 = vadd.f32 %v2170, %v2321
        %v2428 = vadd.f32 %v2171, %v2326
        %v2429 = vadd.f32 %v2172, %v2329
        %v2430 = vadd.f32 %v2173, %v2334
        %v2431 = vadd.f32 %v2174, %v2337
        %v2432 = vadd.f32 %v2175, %v2342
        %v2433 = vadd.f32 %v2176, %v2345
        %v2434 = vadd.f32 %v2177, %v2350
        %v2435 = vadd.f32 %v2178, %v2353
        %v2436 = vadd.f32 %v2179, %v2358
        %v2437 = vadd.f32 %v2180, %v2361
        %v2438 = vadd.f32 %v2181, %v2366
        %v2439 = vadd.f32 %v2182, %v2369
        %v2440 = vadd.f32 %v2183, %v2374
        %v2441 = vadd.f32 %v2184, %v2377
        %v2442 = vadd.f32 %v2185, %v2382
        %v2443 = vadd.f32 %v2186, %v2385
        %v2444 = vadd.f32 %v2187, %v2390
        %v2445 = vadd.f32 %v2188, %v2393
        %v2446 = vadd.f32 %v2189, %v2398
        %v2447 = vadd.f32 %v2190, %v2401
        %v2448 = vadd.f32 %v2191, %v2406
        %v2449 = vadd.f32 %v2192, %v2409
        %v2450 = vadd.f32 %v2193, %v2414
        %v2451 = vadd.f32 %v2194, %v2417
        %2452 = vst [vmem:[%s230] sm:$0xff] %v2420
        %2453 = vst [vmem:[%s230 + $0x8] sm:$0xff] %v2421
        %2454 = vst [vmem:[%s230 + $0x10] sm:$0xff] %v2422
        %2455 = vst [vmem:[%s230 + $0x18] sm:$0xff] %v2423
        %2456 = vst [vmem:[%s230 + $0x20] sm:$0xff] %v2424
        %2457 = vst [vmem:[%s230 + $0x28] sm:$0xff] %v2425
        %2458 = vst [vmem:[%s230 + $0x30] sm:$0xff] %v2426
        %2459 = vst [vmem:[%s230 + $0x38] sm:$0xff] %v2427
        %2460 = vst [vmem:[%s230 + $0x40] sm:$0xff] %v2428
        %2461 = vst [vmem:[%s230 + $0x48] sm:$0xff] %v2429
        %2462 = vst [vmem:[%s230 + $0x50] sm:$0xff] %v2430
        %2463 = vst [vmem:[%s230 + $0x58] sm:$0xff] %v2431
        %2464 = vst [vmem:[%s230 + $0x60] sm:$0xff] %v2432
        %2465 = vst [vmem:[%s230 + $0x68] sm:$0xff] %v2433
        %2466 = vst [vmem:[%s230 + $0x70] sm:$0xff] %v2434
        %2467 = vst [vmem:[%s230 + $0x78] sm:$0xff] %v2435
        %2468 = vst [vmem:[%s230 + $0x80] sm:$0xff] %v2436
        %2469 = vst [vmem:[%s230 + $0x88] sm:$0xff] %v2437
        %2470 = vst [vmem:[%s230 + $0x90] sm:$0xff] %v2438
        %2471 = vst [vmem:[%s230 + $0x98] sm:$0xff] %v2439
        %2472 = vst [vmem:[%s230 + $0xa0] sm:$0xff] %v2440
        %2473 = vst [vmem:[%s230 + $0xa8] sm:$0xff] %v2441
        %2474 = vst [vmem:[%s230 + $0xb0] sm:$0xff] %v2442
        %2475 = vst [vmem:[%s230 + $0xb8] sm:$0xff] %v2443
        %2476 = vst [vmem:[%s230 + $0xc0] sm:$0xff] %v2444
        %2477 = vst [vmem:[%s230 + $0xc8] sm:$0xff] %v2445
        %2478 = vst [vmem:[%s230 + $0xd0] sm:$0xff] %v2446
        %2479 = vst [vmem:[%s230 + $0xd8] sm:$0xff] %v2447
        %2480 = vst [vmem:[%s230 + $0xe0] sm:$0xff] %v2448
        %2481 = vst [vmem:[%s230 + $0xe8] sm:$0xff] %v2449
        %2482 = vst [vmem:[%s230 + $0xf0] sm:$0xff] %v2450
        %2483 = vst [vmem:[%s230 + $0xf8] sm:$0xff] %v2451
        %p2484 = scmp.eq.s32.totalorder %s24, 1
        // Predicated region
        $region45: #{metaformer_block.1} parent=39 // pred_check
          %p2485 = pneg %p2484
        $region46: #{metaformer_block.1} parent=39 // pred_check_branch
          %2487 = sbr.rel (%p2485) target = $region48
        $region47: #{metaformer_block.1} parent=39 // pred_region
          %v2488 = vld [vmem:[%s1 + $0x5] sm:$0x1]
          %v2489 = vld [vmem:[%s1 + $0x6] sm:$0x1]
          %v2490 = vld [vmem:[#allocation2] sm:$0xff]
          %v2491 = vld [vmem:[#allocation2 + $0x8] sm:$0xff]
          %v2492 = vld [vmem:[#allocation2 + $0x10] sm:$0xff]
          %v2493 = vld [vmem:[#allocation2 + $0x18] sm:$0xff]
          %v2494 = vld [vmem:[#allocation2 + $0x20] sm:$0xff]
          %v2495 = vld [vmem:[#allocation2 + $0x28] sm:$0xff]
          %v2496 = vld [vmem:[#allocation2 + $0x30] sm:$0xff]
          %v2497 = vld [vmem:[#allocation2 + $0x38] sm:$0xff]
          %v2498 = vld [vmem:[#allocation2 + $0x40] sm:$0xff]
          %v2499 = vld [vmem:[#allocation2 + $0x48] sm:$0xff]
          %v2500 = vld [vmem:[#allocation2 + $0x50] sm:$0xff]
          %v2501 = vld [vmem:[#allocation2 + $0x58] sm:$0xff]
          %v2502 = vld [vmem:[#allocation2 + $0x60] sm:$0xff]
          %v2503 = vld [vmem:[#allocation2 + $0x68] sm:$0xff]
          %v2504 = vld [vmem:[#allocation2 + $0x70] sm:$0xff]
          %v2505 = vld [vmem:[#allocation2 + $0x78] sm:$0xff]
          %v2506 = vld [vmem:[#allocation2 + $0x80] sm:$0xff]
          %v2507 = vld [vmem:[#allocation2 + $0x88] sm:$0xff]
          %v2508 = vld [vmem:[#allocation2 + $0x90] sm:$0xff]
          %v2509 = vld [vmem:[#allocation2 + $0x98] sm:$0xff]
          %v2510 = vld [vmem:[#allocation2 + $0xa0] sm:$0xff]
          %v2511 = vld [vmem:[#allocation2 + $0xa8] sm:$0xff]
          %v2512 = vld [vmem:[#allocation2 + $0xb0] sm:$0xff]
          %v2513 = vld [vmem:[#allocation2 + $0xb8] sm:$0xff]
          %v2514 = vld [vmem:[#allocation2 + $0xc0] sm:$0xff]
          %v2515 = vld [vmem:[#allocation2 + $0xc8] sm:$0xff]
          %v2516 = vld [vmem:[#allocation2 + $0xd0] sm:$0xff]
          %v2517 = vld [vmem:[#allocation2 + $0xd8] sm:$0xff]
          %v2518 = vld [vmem:[#allocation2 + $0xe0] sm:$0xff]
          %v2519 = vld [vmem:[#allocation2 + $0xe8] sm:$0xff]
          %v2520 = vld [vmem:[#allocation2 + $0xf0] sm:$0xff]
          %v2521 = vld [vmem:[#allocation2 + $0xf8] sm:$0xff]
          %v2522 = vld [vmem:[%s230] sm:$0xff]
          %v2523 = vld [vmem:[%s230 + $0x8] sm:$0xff]
          %v2524 = vld [vmem:[%s230 + $0x10] sm:$0xff]
          %v2525 = vld [vmem:[%s230 + $0x18] sm:$0xff]
          %v2526 = vld [vmem:[%s230 + $0x20] sm:$0xff]
          %v2527 = vld [vmem:[%s230 + $0x28] sm:$0xff]
          %v2528 = vld [vmem:[%s230 + $0x30] sm:$0xff]
          %v2529 = vld [vmem:[%s230 + $0x38] sm:$0xff]
          %v2530 = vld [vmem:[%s230 + $0x40] sm:$0xff]
          %v2531 = vld [vmem:[%s230 + $0x48] sm:$0xff]
          %v2532 = vld [vmem:[%s230 + $0x50] sm:$0xff]
          %v2533 = vld [vmem:[%s230 + $0x58] sm:$0xff]
          %v2534 = vld [vmem:[%s230 + $0x60] sm:$0xff]
          %v2535 = vld [vmem:[%s230 + $0x68] sm:$0xff]
          %v2536 = vld [vmem:[%s230 + $0x70] sm:$0xff]
          %v2537 = vld [vmem:[%s230 + $0x78] sm:$0xff]
          %v2538 = vld [vmem:[%s230 + $0x80] sm:$0xff]
          %v2539 = vld [vmem:[%s230 + $0x88] sm:$0xff]
          %v2540 = vld [vmem:[%s230 + $0x90] sm:$0xff]
          %v2541 = vld [vmem:[%s230 + $0x98] sm:$0xff]
          %v2542 = vld [vmem:[%s230 + $0xa0] sm:$0xff]
          %v2543 = vld [vmem:[%s230 + $0xa8] sm:$0xff]
          %v2544 = vld [vmem:[%s230 + $0xb0] sm:$0xff]
          %v2545 = vld [vmem:[%s230 + $0xb8] sm:$0xff]
          %v2546 = vld [vmem:[%s230 + $0xc0] sm:$0xff]
          %v2547 = vld [vmem:[%s230 + $0xc8] sm:$0xff]
          %v2548 = vld [vmem:[%s230 + $0xd0] sm:$0xff]
          %v2549 = vld [vmem:[%s230 + $0xd8] sm:$0xff]
          %v2550 = vld [vmem:[%s230 + $0xe0] sm:$0xff]
          %v2551 = vld [vmem:[%s230 + $0xe8] sm:$0xff]
          %v2552 = vld [vmem:[%s230 + $0xf0] sm:$0xff]
          %v2553 = vld [vmem:[%s230 + $0xf8] sm:$0xff]
          %v2554 = vlaneseq
          %v2555 = vshrl.u32 %v2554, 7
          %v2556 = vsub.s32 0, %v2555
          %v2557 = vrot.slane %v2489, %v2556
          %v2558 = vadd.f32 %v2522, %v2557
          %v2559 = vadd.f32 %v2523, %v2557
          %v2560 = vadd.f32 %v2524, %v2557
          %v2561 = vadd.f32 %v2525, %v2557
          %v2562 = vadd.f32 %v2526, %v2557
          %v2563 = vadd.f32 %v2527, %v2557
          %v2564 = vadd.f32 %v2528, %v2557
          %v2565 = vadd.f32 %v2529, %v2557
          %v2566 = vadd.f32 %v2530, %v2557
          %v2567 = vadd.f32 %v2531, %v2557
          %v2568 = vadd.f32 %v2532, %v2557
          %v2569 = vadd.f32 %v2533, %v2557
          %v2570 = vadd.f32 %v2534, %v2557
          %v2571 = vadd.f32 %v2535, %v2557
          %v2572 = vadd.f32 %v2536, %v2557
          %v2573 = vadd.f32 %v2537, %v2557
          %v2574 = vadd.f32 %v2538, %v2557
          %v2575 = vadd.f32 %v2539, %v2557
          %v2576 = vadd.f32 %v2540, %v2557
          %v2577 = vadd.f32 %v2541, %v2557
          %v2578 = vadd.f32 %v2542, %v2557
          %v2579 = vadd.f32 %v2543, %v2557
          %v2580 = vadd.f32 %v2544, %v2557
          %v2581 = vadd.f32 %v2545, %v2557
          %v2582 = vadd.f32 %v2546, %v2557
          %v2583 = vadd.f32 %v2547, %v2557
          %v2584 = vadd.f32 %v2548, %v2557
          %v2585 = vadd.f32 %v2549, %v2557
          %v2586 = vadd.f32 %v2550, %v2557
          %v2587 = vadd.f32 %v2551, %v2557
          %v2588 = vadd.f32 %v2552, %v2557
          %v2589 = vadd.f32 %v2553, %v2557
          %v2590 = vlaneseq
          %v2591 = vshrl.u32 %v2590, 7
          %v2592 = vsub.s32 0, %v2591
          %v2593 = vrot.slane %v2488, %v2592
          %v2594 = vmul.f32 %v2593, %v2558
          %v2595 = vmul.f32 %v2593, %v2559
          %v2596 = vmul.f32 %v2593, %v2560
          %v2597 = vmul.f32 %v2593, %v2561
          %v2598 = vmul.f32 %v2593, %v2562
          %v2599 = vmul.f32 %v2593, %v2563
          %v2600 = vmul.f32 %v2593, %v2564
          %v2601 = vmul.f32 %v2593, %v2565
          %v2602 = vmul.f32 %v2593, %v2566
          %v2603 = vmul.f32 %v2593, %v2567
          %v2604 = vmul.f32 %v2593, %v2568
          %v2605 = vmul.f32 %v2593, %v2569
          %v2606 = vmul.f32 %v2593, %v2570
          %v2607 = vmul.f32 %v2593, %v2571
          %v2608 = vmul.f32 %v2593, %v2572
          %v2609 = vmul.f32 %v2593, %v2573
          %v2610 = vmul.f32 %v2593, %v2574
          %v2611 = vmul.f32 %v2593, %v2575
          %v2612 = vmul.f32 %v2593, %v2576
          %v2613 = vmul.f32 %v2593, %v2577
          %v2614 = vmul.f32 %v2593, %v2578
          %v2615 = vmul.f32 %v2593, %v2579
          %v2616 = vmul.f32 %v2593, %v2580
          %v2617 = vmul.f32 %v2593, %v2581
          %v2618 = vmul.f32 %v2593, %v2582
          %v2619 = vmul.f32 %v2593, %v2583
          %v2620 = vmul.f32 %v2593, %v2584
          %v2621 = vmul.f32 %v2593, %v2585
          %v2622 = vmul.f32 %v2593, %v2586
          %v2623 = vmul.f32 %v2593, %v2587
          %v2624 = vmul.f32 %v2593, %v2588
          %v2625 = vmul.f32 %v2593, %v2589
          %v2626 = vadd.f32 %v2490, %v2594
          %v2627 = vadd.f32 %v2491, %v2595
          %v2628 = vadd.f32 %v2492, %v2596
          %v2629 = vadd.f32 %v2493, %v2597
          %v2630 = vadd.f32 %v2494, %v2598
          %v2631 = vadd.f32 %v2495, %v2599
          %v2632 = vadd.f32 %v2496, %v2600
          %v2633 = vadd.f32 %v2497, %v2601
          %v2634 = vadd.f32 %v2498, %v2602
          %v2635 = vadd.f32 %v2499, %v2603
          %v2636 = vadd.f32 %v2500, %v2604
          %v2637 = vadd.f32 %v2501, %v2605
          %v2638 = vadd.f32 %v2502, %v2606
          %v2639 = vadd.f32 %v2503, %v2607
          %v2640 = vadd.f32 %v2504, %v2608
          %v2641 = vadd.f32 %v2505, %v2609
          %v2642 = vadd.f32 %v2506, %v2610
          %v2643 = vadd.f32 %v2507, %v2611
          %v2644 = vadd.f32 %v2508, %v2612
          %v2645 = vadd.f32 %v2509, %v2613
          %v2646 = vadd.f32 %v2510, %v2614
          %v2647 = vadd.f32 %v2511, %v2615
          %v2648 = vadd.f32 %v2512, %v2616
          %v2649 = vadd.f32 %v2513, %v2617
          %v2650 = vadd.f32 %v2514, %v2618
          %v2651 = vadd.f32 %v2515, %v2619
          %v2652 = vadd.f32 %v2516, %v2620
          %v2653 = vadd.f32 %v2517, %v2621
          %v2654 = vadd.f32 %v2518, %v2622
          %v2655 = vadd.f32 %v2519, %v2623
          %v2656 = vadd.f32 %v2520, %v2624
          %v2657 = vadd.f32 %v2521, %v2625
          %2658 = vst [vmem:[%s230] sm:$0xff] %v2626
          %2659 = vst [vmem:[%s230 + $0x8] sm:$0xff] %v2627
          %2660 = vst [vmem:[%s230 + $0x10] sm:$0xff] %v2628
          %2661 = vst [vmem:[%s230 + $0x18] sm:$0xff] %v2629
          %2662 = vst [vmem:[%s230 + $0x20] sm:$0xff] %v2630
          %2663 = vst [vmem:[%s230 + $0x28] sm:$0xff] %v2631
          %2664 = vst [vmem:[%s230 + $0x30] sm:$0xff] %v2632
          %2665 = vst [vmem:[%s230 + $0x38] sm:$0xff] %v2633
          %2666 = vst [vmem:[%s230 + $0x40] sm:$0xff] %v2634
          %2667 = vst [vmem:[%s230 + $0x48] sm:$0xff] %v2635
          %2668 = vst [vmem:[%s230 + $0x50] sm:$0xff] %v2636
          %2669 = vst [vmem:[%s230 + $0x58] sm:$0xff] %v2637
          %2670 = vst [vmem:[%s230 + $0x60] sm:$0xff] %v2638
          %2671 = vst [vmem:[%s230 + $0x68] sm:$0xff] %v2639
          %2672 = vst [vmem:[%s230 + $0x70] sm:$0xff] %v2640
          %2673 = vst [vmem:[%s230 + $0x78] sm:$0xff] %v2641
          %2674 = vst [vmem:[%s230 + $0x80] sm:$0xff] %v2642
          %2675 = vst [vmem:[%s230 + $0x88] sm:$0xff] %v2643
          %2676 = vst [vmem:[%s230 + $0x90] sm:$0xff] %v2644
          %2677 = vst [vmem:[%s230 + $0x98] sm:$0xff] %v2645
          %2678 = vst [vmem:[%s230 + $0xa0] sm:$0xff] %v2646
          %2679 = vst [vmem:[%s230 + $0xa8] sm:$0xff] %v2647
          %2680 = vst [vmem:[%s230 + $0xb0] sm:$0xff] %v2648
          %2681 = vst [vmem:[%s230 + $0xb8] sm:$0xff] %v2649
          %2682 = vst [vmem:[%s230 + $0xc0] sm:$0xff] %v2650
          %2683 = vst [vmem:[%s230 + $0xc8] sm:$0xff] %v2651
          %2684 = vst [vmem:[%s230 + $0xd0] sm:$0xff] %v2652
          %2685 = vst [vmem:[%s230 + $0xd8] sm:$0xff] %v2653
          %2686 = vst [vmem:[%s230 + $0xe0] sm:$0xff] %v2654
          %2687 = vst [vmem:[%s230 + $0xe8] sm:$0xff] %v2655
          %2688 = vst [vmem:[%s230 + $0xf0] sm:$0xff] %v2656
          %2689 = vst [vmem:[%s230 + $0xf8] sm:$0xff] %v2657
        $region48: #{metaformer_block.1} parent=39 // pred_fallthru
          _
        %s2690 = sand.u32 %s149, 1
        %s2691 = scalar_lea.sflag [#allocation5], %s2690
        %s2692 = sand.u32 %s149, 1
        %s2693 = smul.addr %s2692, 256
        %s2694 = scalar_lea.vmem [#allocation4], %s2693
        // Predicated region
        $region49: #{metaformer_block.1} parent=39 // pred_check
          %p2695 = pneg %p159
        $region50: #{metaformer_block.1} parent=39 // pred_check_branch
          %2697 = sbr.rel (%p2695) target = $region52
        $region51: #{metaformer_block.1} parent=39 // pred_region
          %s2698 = smul.u32 32, %s23
          %s2700 = ssub.s32 4096, 4096
          %2701 = vsyncadd %s2691, %s2700
          %s2702 = smul.addr %s2698, 128
          %s2703 = scalar_lea.hbm %s5, %s2702
          %s2704 = sshll.u32 %s2694, 4
          %s2705 = int_to_ptr.vmem [resolvable:$true] %s2704
          %2710 = dma.vmem_to_hbm [thread:$0]  %s2705, 4096, %s2703, %s2691, 128, 128, 8
        $region52: #{metaformer_block.1} parent=39 // pred_fallthru
          _
      $region40: #{metaformer_block.1} parent=5 // pred_fallthru
        _
      %p2711 = scmp.le.s32.totalorder 2, %s14
      // Predicated region
      $region53: #{metaformer_block.1} parent=5 // pred_check
        %p2712 = pneg %p2711
      $region54: #{metaformer_block.1} parent=5 // pred_check_branch
        %2714 = sbr.rel (%p2712) target = $region56
      $region55: #{metaformer_block.1} parent=5 // pred_region
        %s2715 = ssub.s32 %s14, 2
        // Predicated region
        $region57: #{metaformer_block.1} parent=55 // pred_check
          %p2716 = pneg %p165
        $region58: #{metaformer_block.1} parent=55 // pred_check_branch
          %2718 = sbr.rel (%p2716) target = $region60
        $region59: #{metaformer_block.1} parent=55 // pred_region
          %s2719 = sand.u32 %s150, 1
          %s2720 = scalar_lea.sflag [#allocation5], %s2719
          %s2721 = sand.u32 %s150, 1
          %s2722 = smul.addr %s2721, 256
          %s2723 = scalar_lea.vmem [#allocation4], %s2722
          %2724 = dma.done %s2720, 4096
        $region60: #{metaformer_block.1} parent=55 // pred_fallthru
          _
      $region56: #{metaformer_block.1} parent=5 // pred_fallthru
        _
    $region6: #{metaformer_block.1} parent=1 // loop_footer
      %s18 = sadd.s32 1, %s14
    $region7: #{metaformer_block.1} parent=1 // loop_footer_branch
      %13 = sbr.rel target = $region3
    $region8: #{metaformer_block.1} parent=1 // loop_exit
      _
    %2725 = vsyncpa [#allocation5], 1
    %s2726 = scalar_lea.sflag [#allocation5], 1
    %2727 = vsyncpa %s2726, 1

</llo_original>
